<compile_context>
chip_gen: v7x
topology: tpu7x:2x2x1
jax: 0.10.0
libtpu: 0.0.40
codegen_flags: <defaults>
</compile_context>

<pallas_src>
import functools

import jax
import jax.numpy as jnp
from jax import lax
from jax.experimental import pallas as pl
from jax.experimental.pallas import tpu as pltpu


# ---------------------------------- kernel ----------------------------------

def _cldice_kernel(yt_ref, yp_ref, o0_ref, o1_ref, o2_ref, o3_ref, *, H, W, iters):
    # Block layout: rows = D*H (sublanes), lanes = K*W (K packed volumes).
    R, L = yt_ref.shape

    # Edge masks, hoisted once per grid step (JAX does not CSE broadcasts).
    row = lax.broadcasted_iota(jnp.int32, (R, L), 0)
    lane = lax.broadcasted_iota(jnp.int32, (R, L), 1)
    m_h0 = (row % H) == 0          # first H-plane of each D slab
    m_h1 = (row % H) == (H - 1)    # last H-plane of each D slab
    m_w0 = (lane % W) == 0         # first W column of each packed volume
    m_w1 = (lane % W) == (W - 1)   # last W column of each packed volume

    # --- neighbor shifts with replicated edges (neutral for min/max pools) ---
    def rows_fwd(x, s):            # result[r] = x[r-s]; first s rows replicated
        return jnp.concatenate([x[:s], x[:R - s]], axis=0)

    def rows_bwd(x, s):            # result[r] = x[r+s]; last s rows replicated
        return jnp.concatenate([x[s:], x[R - s:]], axis=0)

    def up_d(x):                   # x[d-1, h, w]
        return rows_fwd(x, H)

    def dn_d(x):                   # x[d+1, h, w]
        return rows_bwd(x, H)

    def up_h(x):                   # x[d, h-1, w]
        return jnp.where(m_h0, x, rows_fwd(x, 1))

    def dn_h(x):                   # x[d, h+1, w]
        return jnp.where(m_h1, x, rows_bwd(x, 1))

    def up_w(x):                   # x[d, h, w-1]  (XLU lane roll + edge mask)
        return jnp.where(m_w0, x, pltpu.roll(x, 1 % L, axis=1))

    def dn_w(x):                   # x[d, h, w+1]
        return jnp.where(m_w1, x, pltpu.roll(x, (-1) % L, axis=1))

    # --- morphology -----------------------------------------------------------
    def erode(x):                  # 7-point cross min (== 3 separable k=3 min-pools)
        m1 = jnp.minimum(up_d(x), dn_d(x))
        m2 = jnp.minimum(up_h(x), dn_h(x))
        m3 = jnp.minimum(up_w(x), dn_w(x))
        return jnp.minimum(jnp.minimum(m1, m2), jnp.minimum(m3, x))

    def dilate(x):                 # separable 3x3x3 max-pool
        x = jnp.maximum(jnp.maximum(up_d(x), dn_d(x)), x)
        x = jnp.maximum(jnp.maximum(up_h(x), dn_h(x)), x)
        x = jnp.maximum(jnp.maximum(up_w(x), dn_w(x)), x)
        return x

    def soft_open(x):
        return dilate(erode(x))

    def relu(x):
        return jnp.maximum(x, jnp.float32(0.0))

    def soft_skel(img):
        img1 = soft_open(img)
        skel = relu(img - img1)
        for _ in range(iters):
            img = erode(img)
            img1 = soft_open(img)
            delta = relu(img - img1)
            skel = skel + relu(delta - skel * delta)
        return skel

    y_true = yt_ref[...]           # (R, L) f32
    y_pred = yp_ref[...]           # (R, L) f32

    # Interleave each skeleton with its reductions to keep only one skeleton live.
    skel_pred = soft_skel(y_pred)
    s0 = jnp.sum(skel_pred * y_true)   # sum(skel_pred * y_true)
    s1 = jnp.sum(skel_pred)            # sum(skel_pred)

    skel_true = soft_skel(y_true)
    s2 = jnp.sum(skel_true * y_pred)   # sum(skel_true * y_pred)
    s3 = jnp.sum(skel_true)            # sum(skel_true)

    # Lane-dense per-step partial outputs (no resident accumulator -> grid axis
    # can be truly parallel across TensorCores).
    o0_ref[...] = jnp.full((1, 128), s0, dtype=jnp.float32)
    o1_ref[...] = jnp.full((1, 128), s1, dtype=jnp.float32)
    o2_ref[...] = jnp.full((1, 128), s2, dtype=jnp.float32)
    o3_ref[...] = jnp.full((1, 128), s3, dtype=jnp.float32)


# --------------------------------- wrapper ----------------------------------

def soft_cldice(y_true, y_pred, iters=3, smooth=1.0):
    N, C, D, H, W = y_true.shape
    smooth = jnp.float32(smooth)

    if C <= 1:
        # The [:, 1:] slice removes everything: all sums are zero.
        tprec = tsens = jnp.float32(1.0)
        return jnp.float32(1.0) - 2.0 * (tprec * tsens) / (tprec + tsens)

    # Drop channel 0 up front (it never contributes to the sums).
    M = N * (C - 1)
    yt = y_true[:, 1:].astype(jnp.float32).reshape(M, D, H, W)
    yp = y_pred[:, 1:].astype(jnp.float32).reshape(M, D, H, W)

    # Pack K volumes side-by-side along the lane axis for full vreg utilization
    # when W < 128.  Zero-padded volumes have zero skeleton -> contribute nothing.
    K = max(1, 128 // W)
    G = -(-M // K)                    # grid steps
    pad = G * K - M
    if pad:
        zeros = jnp.zeros((pad, D, H, W), jnp.float32)
        yt = jnp.concatenate([yt, zeros], axis=0)
        yp = jnp.concatenate([yp, zeros], axis=0)

    R, L = D * H, K * W

    def pack(a):
        a = a.reshape(G, K, D, H, W)
        a = jnp.transpose(a, (0, 2, 3, 1, 4))     # (G, D, H, K, W)
        return a.reshape(G, R, L)                 # lane index = k*W + w

    ytp = pack(yt)
    ypp = pack(yp)

    vol_spec = pl.BlockSpec((None, R, L), lambda i: (i, 0, 0))
    out_spec = pl.BlockSpec((1, 128), lambda i: (i, 0))

    outs = pl.pallas_call(
        functools.partial(_cldice_kernel, H=H, W=W, iters=iters),
        grid=(G,),
        in_specs=[vol_spec, vol_spec],
        out_specs=[out_spec, out_spec, out_spec, out_spec],
        out_shape=[jax.ShapeDtypeStruct((G, 128), jnp.float32)] * 4,
        compiler_params=pltpu.CompilerParams(
            dimension_semantics=("parallel",),
            vmem_limit_bytes=32 * 1024 * 1024,
        ),
    )(ytp, ypp)

    # Tiny final reduction of the per-step partials (column 0 holds the value).
    sp_yt, sp, st_yp, st = [jnp.sum(o[:, 0]) for o in outs]
    tprec = (sp_yt + smooth) / (sp + smooth)
    tsens = (st_yp + smooth) / (st + smooth)
    return 1.0 - 2.0 * (tprec * tsens) / (tprec + tsens)


# ------------------------- pure-JAX reference (check) ------------------------

def _ref_shift_fwd(x, axis):
    n = x.shape[axis]
    a = lax.slice_in_dim(x, 0, 1, axis=axis)
    b = lax.slice_in_dim(x, 0, n - 1, axis=axis)
    return jnp.concatenate([a, b], axis=axis)


def _ref_shift_bwd(x, axis):
    n = x.shape[axis]
    a = lax.slice_in_dim(x, 1, n, axis=axis)
    b = lax.slice_in_dim(x, n - 1, n, axis=axis)
    return jnp.concatenate([a, b], axis=axis)


def _ref_pool3(x, axis, op):
    return op(op(_ref_shift_fwd(x, axis), x), _ref_shift_bwd(x, axis))


def _ref_erode(x):
    p1 = _ref_pool3(x, 0, jnp.minimum)
    p2 = _ref_pool3(x, 1, jnp.minimum)
    p3 = _ref_pool3(x, 2, jnp.minimum)
    return jnp.minimum(jnp.minimum(p1, p2), p3)


def _ref_dilate(x):
    return _ref_pool3(_ref_pool3(_ref_pool3(x, 0, jnp.maximum), 1, jnp.maximum),
                      2, jnp.maximum)


def _ref_open(x):
    return _ref_dilate(_ref_erode(x))


def _ref_soft_skel(img, iters):
    img1 = _ref_open(img)
    skel = jnp.maximum(img - img1, 0.0)
    for _ in range(iters):
        img = _ref_erode(img)
        img1 = _ref_open(img)
        delta = jnp.maximum(img - img1, 0.0)
        skel = skel + jnp.maximum(delta - skel * delta, 0.0)
    return skel


def _reference(y_true, y_pred, iters=3, smooth=1.0):
    N, C, D, H, W = y_true.shape
    skel = jax.vmap(lambda v: _ref_soft_skel(v, iters))
    sp = skel(y_pred.reshape(N * C, D, H, W)).reshape(N, C, D, H, W)
    st = skel(y_true.reshape(N * C, D, H, W)).reshape(N, C, D, H, W)
    tprec = (jnp.sum((sp * y_true)[:, 1:]) + smooth) / (jnp.sum(sp[:, 1:]) + smooth)
    tsens = (jnp.sum((st * y_pred)[:, 1:]) + smooth) / (jnp.sum(st[:, 1:]) + smooth)
    return 1.0 - 2.0 * (tprec * tsens) / (tprec + tsens)


if __name__ == "__main__":
    # soft_cldice has no learnable parameters (only iter_=3, smooth=1.0).
    key = jax.random.PRNGKey(0)
    k1, k2 = jax.random.split(key)
    N, C, D, H, W = 2, 3, 4, 8, 16
    y_true = jax.random.uniform(k1, (N, C, D, H, W), dtype=jnp.float32)
    y_pred = jax.random.uniform(k2, (N, C, D, H, W), dtype=jnp.float32)

    out = soft_cldice(y_true, y_pred, iters=3, smooth=1.0)
    out = jax.block_until_ready(out)

    ref = _reference(y_true, y_pred, iters=3, smooth=1.0)
    assert jnp.allclose(out, ref, atol=1e-5), (out, ref)
    print("KERNEL_OK")
</pallas_src>

<mosaic_0001>
module attributes {stable_mosaic.version = 11 : i64} {
  func.func @_cldice_kernel(%arg0: i32, %arg1: memref<1x32x128xf32, #tpu.memory_space<vmem>>, %arg2: memref<1x32x128xf32, #tpu.memory_space<vmem>>, %arg3: memref<1x128xf32, #tpu.memory_space<vmem>>, %arg4: memref<1x128xf32, #tpu.memory_space<vmem>>, %arg5: memref<1x128xf32, #tpu.memory_space<vmem>>, %arg6: memref<1x128xf32, #tpu.memory_space<vmem>>) attributes {dimension_semantics = [#tpu.dimension_semantics<parallel>], iteration_bounds = array<i64: 1>, scalar_prefetch = 0 : i64, scratch_operands = 0 : i64, tpu.core_type = #tpu.core_type<tc>, window_params = [{transform_indices = @transform_0, window_bounds = array<i64: 1, 32, 128>}, {transform_indices = @transform_1, window_bounds = array<i64: 1, 32, 128>}, {transform_indices = @transform_2, window_bounds = array<i64: 1, 128>}, {transform_indices = @transform_3, window_bounds = array<i64: 1, 128>}, {transform_indices = @transform_4, window_bounds = array<i64: 1, 128>}, {transform_indices = @transform_5, window_bounds = array<i64: 1, 128>}]} {
    %0 = tpu.iota {dimensions = array<i32: 0>} : vector<32x128xi32>
    %1 = tpu.iota {dimensions = array<i32: 1>} : vector<32x128xi32>
    %c8_i32 = arith.constant 8 : i32
    %c0_i32 = arith.constant 0 : i32
    %2 = arith.cmpi eq, %c8_i32, %c0_i32 : i32
    %c1_i32 = arith.constant 1 : i32
    %3 = arith.select %2, %c1_i32, %c8_i32 : i32
    %4 = vector.broadcast %3 : i32 to vector<32x128xi32>
    %5 = arith.remsi %0, %4 : vector<32x128xi32>
    %c0_i32_0 = arith.constant 0 : i32
    %6 = vector.broadcast %c0_i32_0 : i32 to vector<32x128xi32>
    %7 = arith.cmpi ne, %5, %6 : vector<32x128xi32>
    %c0_i32_1 = arith.constant 0 : i32
    %8 = vector.broadcast %c0_i32_1 : i32 to vector<32x128xi32>
    %9 = arith.cmpi slt, %5, %8 : vector<32x128xi32>
    %c0_i32_2 = arith.constant 0 : i32
    %10 = arith.cmpi slt, %3, %c0_i32_2 : i32
    %11 = vector.broadcast %10 : i1 to vector<32x128xi1>
    %12 = vector.broadcast %11 : vector<32x128xi1> to vector<32x128xi1>
    %13 = arith.xori %9, %12 : vector<32x128xi1>
    %14 = arith.andi %13, %7 : vector<32x128xi1>
    %15 = vector.broadcast %3 : i32 to vector<32x128xi32>
    %16 = arith.addi %5, %15 : vector<32x128xi32>
    %17 = arith.select %14, %16, %5 : vector<32x128xi1>, vector<32x128xi32>
    %c0_i32_3 = arith.constant 0 : i32
    %18 = vector.broadcast %c0_i32_3 : i32 to vector<32x128xi32>
    %19 = arith.cmpi eq, %17, %18 : vector<32x128xi32>
    %c8_i32_4 = arith.constant 8 : i32
    %c0_i32_5 = arith.constant 0 : i32
    %20 = arith.cmpi eq, %c8_i32_4, %c0_i32_5 : i32
    %c1_i32_6 = arith.constant 1 : i32
    %21 = arith.select %20, %c1_i32_6, %c8_i32_4 : i32
    %22 = vector.broadcast %21 : i32 to vector<32x128xi32>
    %23 = arith.remsi %0, %22 : vector<32x128xi32>
    %c0_i32_7 = arith.constant 0 : i32
    %24 = vector.broadcast %c0_i32_7 : i32 to vector<32x128xi32>
    %25 = arith.cmpi ne, %23, %24 : vector<32x128xi32>
    %c0_i32_8 = arith.constant 0 : i32
    %26 = vector.broadcast %c0_i32_8 : i32 to vector<32x128xi32>
    %27 = arith.cmpi slt, %23, %26 : vector<32x128xi32>
    %c0_i32_9 = arith.constant 0 : i32
    %28 = arith.cmpi slt, %21, %c0_i32_9 : i32
    %29 = vector.broadcast %28 : i1 to vector<32x128xi1>
    %30 = vector.broadcast %29 : vector<32x128xi1> to vector<32x128xi1>
    %31 = arith.xori %27, %30 : vector<32x128xi1>
    %32 = arith.andi %31, %25 : vector<32x128xi1>
    %33 = vector.broadcast %21 : i32 to vector<32x128xi32>
    %34 = arith.addi %23, %33 : vector<32x128xi32>
    %35 = arith.select %32, %34, %23 : vector<32x128xi1>, vector<32x128xi32>
    %c7_i32 = arith.constant 7 : i32
    %36 = vector.broadcast %c7_i32 : i32 to vector<32x128xi32>
    %37 = arith.cmpi eq, %35, %36 : vector<32x128xi32>
    %c16_i32 = arith.constant 16 : i32
    %c0_i32_10 = arith.constant 0 : i32
    %38 = arith.cmpi eq, %c16_i32, %c0_i32_10 : i32
    %c1_i32_11 = arith.constant 1 : i32
    %39 = arith.select %38, %c1_i32_11, %c16_i32 : i32
    %40 = vector.broadcast %39 : i32 to vector<32x128xi32>
    %41 = arith.remsi %1, %40 : vector<32x128xi32>
    %c0_i32_12 = arith.constant 0 : i32
    %42 = vector.broadcast %c0_i32_12 : i32 to vector<32x128xi32>
    %43 = arith.cmpi ne, %41, %42 : vector<32x128xi32>
    %c0_i32_13 = arith.constant 0 : i32
    %44 = vector.broadcast %c0_i32_13 : i32 to vector<32x128xi32>
    %45 = arith.cmpi slt, %41, %44 : vector<32x128xi32>
    %c0_i32_14 = arith.constant 0 : i32
    %46 = arith.cmpi slt, %39, %c0_i32_14 : i32
    %47 = vector.broadcast %46 : i1 to vector<32x128xi1>
    %48 = vector.broadcast %47 : vector<32x128xi1> to vector<32x128xi1>
    %49 = arith.xori %45, %48 : vector<32x128xi1>
    %50 = arith.andi %49, %43 : vector<32x128xi1>
    %51 = vector.broadcast %39 : i32 to vector<32x128xi32>
    %52 = arith.addi %41, %51 : vector<32x128xi32>
    %53 = arith.select %50, %52, %41 : vector<32x128xi1>, vector<32x128xi32>
    %c0_i32_15 = arith.constant 0 : i32
    %54 = vector.broadcast %c0_i32_15 : i32 to vector<32x128xi32>
    %55 = arith.cmpi eq, %53, %54 : vector<32x128xi32>
    %c16_i32_16 = arith.constant 16 : i32
    %c0_i32_17 = arith.constant 0 : i32
    %56 = arith.cmpi eq, %c16_i32_16, %c0_i32_17 : i32
    %c1_i32_18 = arith.constant 1 : i32
    %57 = arith.select %56, %c1_i32_18, %c16_i32_16 : i32
    %58 = vector.broadcast %57 : i32 to vector<32x128xi32>
    %59 = arith.remsi %1, %58 : vector<32x128xi32>
    %c0_i32_19 = arith.constant 0 : i32
    %60 = vector.broadcast %c0_i32_19 : i32 to vector<32x128xi32>
    %61 = arith.cmpi ne, %59, %60 : vector<32x128xi32>
    %c0_i32_20 = arith.constant 0 : i32
    %62 = vector.broadcast %c0_i32_20 : i32 to vector<32x128xi32>
    %63 = arith.cmpi slt, %59, %62 : vector<32x128xi32>
    %c0_i32_21 = arith.constant 0 : i32
    %64 = arith.cmpi slt, %57, %c0_i32_21 : i32
    %65 = vector.broadcast %64 : i1 to vector<32x128xi1>
    %66 = vector.broadcast %65 : vector<32x128xi1> to vector<32x128xi1>
    %67 = arith.xori %63, %66 : vector<32x128xi1>
    %68 = arith.andi %67, %61 : vector<32x128xi1>
    %69 = vector.broadcast %57 : i32 to vector<32x128xi32>
    %70 = arith.addi %59, %69 : vector<32x128xi32>
    %71 = arith.select %68, %70, %59 : vector<32x128xi1>, vector<32x128xi32>
    %c15_i32 = arith.constant 15 : i32
    %72 = vector.broadcast %c15_i32 : i32 to vector<32x128xi32>
    %73 = arith.cmpi eq, %71, %72 : vector<32x128xi32>
    %c0 = arith.constant 0 : index
    %c0_22 = arith.constant 0 : index
    %c0_23 = arith.constant 0 : index
    %74 = vector.load %arg1[%c0, %c0_22, %c0_23] : memref<1x32x128xf32, #tpu.memory_space<vmem>>, vector<1x32x128xf32>
    %75 = vector.shape_cast %74 : vector<1x32x128xf32> to vector<32x128xf32>
    %c0_24 = arith.constant 0 : index
    %c0_25 = arith.constant 0 : index
    %c0_26 = arith.constant 0 : index
    %76 = vector.load %arg2[%c0_24, %c0_25, %c0_26] : memref<1x32x128xf32, #tpu.memory_space<vmem>>, vector<1x32x128xf32>
    %77 = vector.shape_cast %76 : vector<1x32x128xf32> to vector<32x128xf32>
    %78 = vector.extract_strided_slice %77 {offsets = [0, 0], sizes = [8, 128], strides = [1, 1]} : vector<32x128xf32> to vector<8x128xf32>
    %79 = vector.extract_strided_slice %77 {offsets = [0, 0], sizes = [24, 128], strides = [1, 1]} : vector<32x128xf32> to vector<24x128xf32>
    %80 = tpu.concatenate %78, %79 in 0 : vector<8x128xf32>, vector<24x128xf32> -> vector<32x128xf32>
    %81 = vector.extract_strided_slice %77 {offsets = [8, 0], sizes = [24, 128], strides = [1, 1]} : vector<32x128xf32> to vector<24x128xf32>
    %82 = vector.extract_strided_slice %77 {offsets = [24, 0], sizes = [8, 128], strides = [1, 1]} : vector<32x128xf32> to vector<8x128xf32>
    %83 = tpu.concatenate %81, %82 in 0 : vector<24x128xf32>, vector<8x128xf32> -> vector<32x128xf32>
    %84 = arith.minimumf %80, %83 : vector<32x128xf32>
    %85 = vector.extract_strided_slice %77 {offsets = [0, 0], sizes = [1, 128], strides = [1, 1]} : vector<32x128xf32> to vector<1x128xf32>
    %86 = vector.extract_strided_slice %77 {offsets = [0, 0], sizes = [31, 128], strides = [1, 1]} : vector<32x128xf32> to vector<31x128xf32>
    %87 = tpu.concatenate %85, %86 in 0 : vector<1x128xf32>, vector<31x128xf32> -> vector<32x128xf32>
    %88 = arith.select %19, %77, %87 : vector<32x128xi1>, vector<32x128xf32>
    %89 = vector.extract_strided_slice %77 {offsets = [1, 0], sizes = [31, 128], strides = [1, 1]} : vector<32x128xf32> to vector<31x128xf32>
    %90 = vector.extract_strided_slice %77 {offsets = [31, 0], sizes = [1, 128], strides = [1, 1]} : vector<32x128xf32> to vector<1x128xf32>
    %91 = tpu.concatenate %89, %90 in 0 : vector<31x128xf32>, vector<1x128xf32> -> vector<32x128xf32>
    %92 = arith.select %37, %77, %91 : vector<32x128xi1>, vector<32x128xf32>
    %93 = arith.minimumf %88, %92 : vector<32x128xf32>
    %c1_i32_27 = arith.constant 1 : i32
    %94 = tpu.dynamic_rotate %77 by %c1_i32_27 dim 1 : vector<32x128xf32>, i32 -> vector<32x128xf32>
    %95 = arith.select %55, %77, %94 : vector<32x128xi1>, vector<32x128xf32>
    %c127_i32 = arith.constant 127 : i32
    %96 = tpu.dynamic_rotate %77 by %c127_i32 dim 1 : vector<32x128xf32>, i32 -> vector<32x128xf32>
    %97 = arith.select %73, %77, %96 : vector<32x128xi1>, vector<32x128xf32>
    %98 = arith.minimumf %95, %97 : vector<32x128xf32>
    %99 = arith.minimumf %84, %93 : vector<32x128xf32>
    %100 = arith.minimumf %98, %77 : vector<32x128xf32>
    %101 = arith.minimumf %99, %100 : vector<32x128xf32>
    %102 = vector.extract_strided_slice %101 {offsets = [0, 0], sizes = [8, 128], strides = [1, 1]} : vector<32x128xf32> to vector<8x128xf32>
    %103 = vector.extract_strided_slice %101 {offsets = [0, 0], sizes = [24, 128], strides = [1, 1]} : vector<32x128xf32> to vector<24x128xf32>
    %104 = tpu.concatenate %102, %103 in 0 : vector<8x128xf32>, vector<24x128xf32> -> vector<32x128xf32>
    %105 = vector.extract_strided_slice %101 {offsets = [8, 0], sizes = [24, 128], strides = [1, 1]} : vector<32x128xf32> to vector<24x128xf32>
    %106 = vector.extract_strided_slice %101 {offsets = [24, 0], sizes = [8, 128], strides = [1, 1]} : vector<32x128xf32> to vector<8x128xf32>
    %107 = tpu.concatenate %105, %106 in 0 : vector<24x128xf32>, vector<8x128xf32> -> vector<32x128xf32>
    %108 = arith.maximumf %104, %107 : vector<32x128xf32>
    %109 = arith.maximumf %108, %101 : vector<32x128xf32>
    %110 = vector.extract_strided_slice %109 {offsets = [0, 0], sizes = [1, 128], strides = [1, 1]} : vector<32x128xf32> to vector<1x128xf32>
    %111 = vector.extract_strided_slice %109 {offsets = [0, 0], sizes = [31, 128], strides = [1, 1]} : vector<32x128xf32> to vector<31x128xf32>
    %112 = tpu.concatenate %110, %111 in 0 : vector<1x128xf32>, vector<31x128xf32> -> vector<32x128xf32>
    %113 = arith.select %19, %109, %112 : vector<32x128xi1>, vector<32x128xf32>
    %114 = vector.extract_strided_slice %109 {offsets = [1, 0], sizes = [31, 128], strides = [1, 1]} : vector<32x128xf32> to vector<31x128xf32>
    %115 = vector.extract_strided_slice %109 {offsets = [31, 0], sizes = [1, 128], strides = [1, 1]} : vector<32x128xf32> to vector<1x128xf32>
    %116 = tpu.concatenate %114, %115 in 0 : vector<31x128xf32>, vector<1x128xf32> -> vector<32x128xf32>
    %117 = arith.select %37, %109, %116 : vector<32x128xi1>, vector<32x128xf32>
    %118 = arith.maximumf %113, %117 : vector<32x128xf32>
    %119 = arith.maximumf %118, %109 : vector<32x128xf32>
    %c1_i32_28 = arith.constant 1 : i32
    %120 = tpu.dynamic_rotate %119 by %c1_i32_28 dim 1 : vector<32x128xf32>, i32 -> vector<32x128xf32>
    %121 = arith.select %55, %119, %120 : vector<32x128xi1>, vector<32x128xf32>
    %c127_i32_29 = arith.constant 127 : i32
    %122 = tpu.dynamic_rotate %119 by %c127_i32_29 dim 1 : vector<32x128xf32>, i32 -> vector<32x128xf32>
    %123 = arith.select %73, %119, %122 : vector<32x128xi1>, vector<32x128xf32>
    %124 = arith.maximumf %121, %123 : vector<32x128xf32>
    %125 = arith.maximumf %124, %119 : vector<32x128xf32>
    %126 = arith.subf %77, %125 : vector<32x128xf32>
    %cst = arith.constant 0.000000e+00 : f32
    %127 = vector.broadcast %cst : f32 to vector<32x128xf32>
    %128 = arith.maximumf %126, %127 : vector<32x128xf32>
    %129 = vector.extract_strided_slice %77 {offsets = [0, 0], sizes = [8, 128], strides = [1, 1]} : vector<32x128xf32> to vector<8x128xf32>
    %130 = vector.extract_strided_slice %77 {offsets = [0, 0], sizes = [24, 128], strides = [1, 1]} : vector<32x128xf32> to vector<24x128xf32>
    %131 = tpu.concatenate %129, %130 in 0 : vector<8x128xf32>, vector<24x128xf32> -> vector<32x128xf32>
    %132 = vector.extract_strided_slice %77 {offsets = [8, 0], sizes = [24, 128], strides = [1, 1]} : vector<32x128xf32> to vector<24x128xf32>
    %133 = vector.extract_strided_slice %77 {offsets = [24, 0], sizes = [8, 128], strides = [1, 1]} : vector<32x128xf32> to vector<8x128xf32>
    %134 = tpu.concatenate %132, %133 in 0 : vector<24x128xf32>, vector<8x128xf32> -> vector<32x128xf32>
    %135 = arith.minimumf %131, %134 : vector<32x128xf32>
    %136 = vector.extract_strided_slice %77 {offsets = [0, 0], sizes = [1, 128], strides = [1, 1]} : vector<32x128xf32> to vector<1x128xf32>
    %137 = vector.extract_strided_slice %77 {offsets = [0, 0], sizes = [31, 128], strides = [1, 1]} : vector<32x128xf32> to vector<31x128xf32>
    %138 = tpu.concatenate %136, %137 in 0 : vector<1x128xf32>, vector<31x128xf32> -> vector<32x128xf32>
    %139 = arith.select %19, %77, %138 : vector<32x128xi1>, vector<32x128xf32>
    %140 = vector.extract_strided_slice %77 {offsets = [1, 0], sizes = [31, 128], strides = [1, 1]} : vector<32x128xf32> to vector<31x128xf32>
    %141 = vector.extract_strided_slice %77 {offsets = [31, 0], sizes = [1, 128], strides = [1, 1]} : vector<32x128xf32> to vector<1x128xf32>
    %142 = tpu.concatenate %140, %141 in 0 : vector<31x128xf32>, vector<1x128xf32> -> vector<32x128xf32>
    %143 = arith.select %37, %77, %142 : vector<32x128xi1>, vector<32x128xf32>
    %144 = arith.minimumf %139, %143 : vector<32x128xf32>
    %c1_i32_30 = arith.constant 1 : i32
    %145 = tpu.dynamic_rotate %77 by %c1_i32_30 dim 1 : vector<32x128xf32>, i32 -> vector<32x128xf32>
    %146 = arith.select %55, %77, %145 : vector<32x128xi1>, vector<32x128xf32>
    %c127_i32_31 = arith.constant 127 : i32
    %147 = tpu.dynamic_rotate %77 by %c127_i32_31 dim 1 : vector<32x128xf32>, i32 -> vector<32x128xf32>
    %148 = arith.select %73, %77, %147 : vector<32x128xi1>, vector<32x128xf32>
    %149 = arith.minimumf %146, %148 : vector<32x128xf32>
    %150 = arith.minimumf %135, %144 : vector<32x128xf32>
    %151 = arith.minimumf %149, %77 : vector<32x128xf32>
    %152 = arith.minimumf %150, %151 : vector<32x128xf32>
    %153 = vector.extract_strided_slice %152 {offsets = [0, 0], sizes = [8, 128], strides = [1, 1]} : vector<32x128xf32> to vector<8x128xf32>
    %154 = vector.extract_strided_slice %152 {offsets = [0, 0], sizes = [24, 128], strides = [1, 1]} : vector<32x128xf32> to vector<24x128xf32>
    %155 = tpu.concatenate %153, %154 in 0 : vector<8x128xf32>, vector<24x128xf32> -> vector<32x128xf32>
    %156 = vector.extract_strided_slice %152 {offsets = [8, 0], sizes = [24, 128], strides = [1, 1]} : vector<32x128xf32> to vector<24x128xf32>
    %157 = vector.extract_strided_slice %152 {offsets = [24, 0], sizes = [8, 128], strides = [1, 1]} : vector<32x128xf32> to vector<8x128xf32>
    %158 = tpu.concatenate %156, %157 in 0 : vector<24x128xf32>, vector<8x128xf32> -> vector<32x128xf32>
    %159 = arith.minimumf %155, %158 : vector<32x128xf32>
    %160 = vector.extract_strided_slice %152 {offsets = [0, 0], sizes = [1, 128], strides = [1, 1]} : vector<32x128xf32> to vector<1x128xf32>
    %161 = vector.extract_strided_slice %152 {offsets = [0, 0], sizes = [31, 128], strides = [1, 1]} : vector<32x128xf32> to vector<31x128xf32>
    %162 = tpu.concatenate %160, %161 in 0 : vector<1x128xf32>, vector<31x128xf32> -> vector<32x128xf32>
    %163 = arith.select %19, %152, %162 : vector<32x128xi1>, vector<32x128xf32>
    %164 = vector.extract_strided_slice %152 {offsets = [1, 0], sizes = [31, 128], strides = [1, 1]} : vector<32x128xf32> to vector<31x128xf32>
    %165 = vector.extract_strided_slice %152 {offsets = [31, 0], sizes = [1, 128], strides = [1, 1]} : vector<32x128xf32> to vector<1x128xf32>
    %166 = tpu.concatenate %164, %165 in 0 : vector<31x128xf32>, vector<1x128xf32> -> vector<32x128xf32>
    %167 = arith.select %37, %152, %166 : vector<32x128xi1>, vector<32x128xf32>
    %168 = arith.minimumf %163, %167 : vector<32x128xf32>
    %c1_i32_32 = arith.constant 1 : i32
    %169 = tpu.dynamic_rotate %152 by %c1_i32_32 dim 1 : vector<32x128xf32>, i32 -> vector<32x128xf32>
    %170 = arith.select %55, %152, %169 : vector<32x128xi1>, vector<32x128xf32>
    %c127_i32_33 = arith.constant 127 : i32
    %171 = tpu.dynamic_rotate %152 by %c127_i32_33 dim 1 : vector<32x128xf32>, i32 -> vector<32x128xf32>
    %172 = arith.select %73, %152, %171 : vector<32x128xi1>, vector<32x128xf32>
    %173 = arith.minimumf %170, %172 : vector<32x128xf32>
    %174 = arith.minimumf %159, %168 : vector<32x128xf32>
    %175 = arith.minimumf %173, %152 : vector<32x128xf32>
    %176 = arith.minimumf %174, %175 : vector<32x128xf32>
    %177 = vector.extract_strided_slice %176 {offsets = [0, 0], sizes = [8, 128], strides = [1, 1]} : vector<32x128xf32> to vector<8x128xf32>
    %178 = vector.extract_strided_slice %176 {offsets = [0, 0], sizes = [24, 128], strides = [1, 1]} : vector<32x128xf32> to vector<24x128xf32>
    %179 = tpu.concatenate %177, %178 in 0 : vector<8x128xf32>, vector<24x128xf32> -> vector<32x128xf32>
    %180 = vector.extract_strided_slice %176 {offsets = [8, 0], sizes = [24, 128], strides = [1, 1]} : vector<32x128xf32> to vector<24x128xf32>
    %181 = vector.extract_strided_slice %176 {offsets = [24, 0], sizes = [8, 128], strides = [1, 1]} : vector<32x128xf32> to vector<8x128xf32>
    %182 = tpu.concatenate %180, %181 in 0 : vector<24x128xf32>, vector<8x128xf32> -> vector<32x128xf32>
    %183 = arith.maximumf %179, %182 : vector<32x128xf32>
    %184 = arith.maximumf %183, %176 : vector<32x128xf32>
    %185 = vector.extract_strided_slice %184 {offsets = [0, 0], sizes = [1, 128], strides = [1, 1]} : vector<32x128xf32> to vector<1x128xf32>
    %186 = vector.extract_strided_slice %184 {offsets = [0, 0], sizes = [31, 128], strides = [1, 1]} : vector<32x128xf32> to vector<31x128xf32>
    %187 = tpu.concatenate %185, %186 in 0 : vector<1x128xf32>, vector<31x128xf32> -> vector<32x128xf32>
    %188 = arith.select %19, %184, %187 : vector<32x128xi1>, vector<32x128xf32>
    %189 = vector.extract_strided_slice %184 {offsets = [1, 0], sizes = [31, 128], strides = [1, 1]} : vector<32x128xf32> to vector<31x128xf32>
    %190 = vector.extract_strided_slice %184 {offsets = [31, 0], sizes = [1, 128], strides = [1, 1]} : vector<32x128xf32> to vector<1x128xf32>
    %191 = tpu.concatenate %189, %190 in 0 : vector<31x128xf32>, vector<1x128xf32> -> vector<32x128xf32>
    %192 = arith.select %37, %184, %191 : vector<32x128xi1>, vector<32x128xf32>
    %193 = arith.maximumf %188, %192 : vector<32x128xf32>
    %194 = arith.maximumf %193, %184 : vector<32x128xf32>
    %c1_i32_34 = arith.constant 1 : i32
    %195 = tpu.dynamic_rotate %194 by %c1_i32_34 dim 1 : vector<32x128xf32>, i32 -> vector<32x128xf32>
    %196 = arith.select %55, %194, %195 : vector<32x128xi1>, vector<32x128xf32>
    %c127_i32_35 = arith.constant 127 : i32
    %197 = tpu.dynamic_rotate %194 by %c127_i32_35 dim 1 : vector<32x128xf32>, i32 -> vector<32x128xf32>
    %198 = arith.select %73, %194, %197 : vector<32x128xi1>, vector<32x128xf32>
    %199 = arith.maximumf %196, %198 : vector<32x128xf32>
    %200 = arith.maximumf %199, %194 : vector<32x128xf32>
    %201 = arith.subf %152, %200 : vector<32x128xf32>
    %cst_36 = arith.constant 0.000000e+00 : f32
    %202 = vector.broadcast %cst_36 : f32 to vector<32x128xf32>
    %203 = arith.maximumf %201, %202 : vector<32x128xf32>
    %204 = arith.mulf %128, %203 : vector<32x128xf32>
    %205 = arith.subf %203, %204 : vector<32x128xf32>
    %cst_37 = arith.constant 0.000000e+00 : f32
    %206 = vector.broadcast %cst_37 : f32 to vector<32x128xf32>
    %207 = arith.maximumf %205, %206 : vector<32x128xf32>
    %208 = arith.addf %128, %207 : vector<32x128xf32>
    %209 = vector.extract_strided_slice %152 {offsets = [0, 0], sizes = [8, 128], strides = [1, 1]} : vector<32x128xf32> to vector<8x128xf32>
    %210 = vector.extract_strided_slice %152 {offsets = [0, 0], sizes = [24, 128], strides = [1, 1]} : vector<32x128xf32> to vector<24x128xf32>
    %211 = tpu.concatenate %209, %210 in 0 : vector<8x128xf32>, vector<24x128xf32> -> vector<32x128xf32>
    %212 = vector.extract_strided_slice %152 {offsets = [8, 0], sizes = [24, 128], strides = [1, 1]} : vector<32x128xf32> to vector<24x128xf32>
    %213 = vector.extract_strided_slice %152 {offsets = [24, 0], sizes = [8, 128], strides = [1, 1]} : vector<32x128xf32> to vector<8x128xf32>
    %214 = tpu.concatenate %212, %213 in 0 : vector<24x128xf32>, vector<8x128xf32> -> vector<32x128xf32>
    %215 = arith.minimumf %211, %214 : vector<32x128xf32>
    %216 = vector.extract_strided_slice %152 {offsets = [0, 0], sizes = [1, 128], strides = [1, 1]} : vector<32x128xf32> to vector<1x128xf32>
    %217 = vector.extract_strided_slice %152 {offsets = [0, 0], sizes = [31, 128], strides = [1, 1]} : vector<32x128xf32> to vector<31x128xf32>
    %218 = tpu.concatenate %216, %217 in 0 : vector<1x128xf32>, vector<31x128xf32> -> vector<32x128xf32>
    %219 = arith.select %19, %152, %218 : vector<32x128xi1>, vector<32x128xf32>
    %220 = vector.extract_strided_slice %152 {offsets = [1, 0], sizes = [31, 128], strides = [1, 1]} : vector<32x128xf32> to vector<31x128xf32>
    %221 = vector.extract_strided_slice %152 {offsets = [31, 0], sizes = [1, 128], strides = [1, 1]} : vector<32x128xf32> to vector<1x128xf32>
    %222 = tpu.concatenate %220, %221 in 0 : vector<31x128xf32>, vector<1x128xf32> -> vector<32x128xf32>
    %223 = arith.select %37, %152, %222 : vector<32x128xi1>, vector<32x128xf32>
    %224 = arith.minimumf %219, %223 : vector<32x128xf32>
    %c1_i32_38 = arith.constant 1 : i32
    %225 = tpu.dynamic_rotate %152 by %c1_i32_38 dim 1 : vector<32x128xf32>, i32 -> vector<32x128xf32>
    %226 = arith.select %55, %152, %225 : vector<32x128xi1>, vector<32x128xf32>
    %c127_i32_39 = arith.constant 127 : i32
    %227 = tpu.dynamic_rotate %152 by %c127_i32_39 dim 1 : vector<32x128xf32>, i32 -> vector<32x128xf32>
    %228 = arith.select %73, %152, %227 : vector<32x128xi1>, vector<32x128xf32>
    %229 = arith.minimumf %226, %228 : vector<32x128xf32>
    %230 = arith.minimumf %215, %224 : vector<32x128xf32>
    %231 = arith.minimumf %229, %152 : vector<32x128xf32>
    %232 = arith.minimumf %230, %231 : vector<32x128xf32>
    %233 = vector.extract_strided_slice %232 {offsets = [0, 0], sizes = [8, 128], strides = [1, 1]} : vector<32x128xf32> to vector<8x128xf32>
    %234 = vector.extract_strided_slice %232 {offsets = [0, 0], sizes = [24, 128], strides = [1, 1]} : vector<32x128xf32> to vector<24x128xf32>
    %235 = tpu.concatenate %233, %234 in 0 : vector<8x128xf32>, vector<24x128xf32> -> vector<32x128xf32>
    %236 = vector.extract_strided_slice %232 {offsets = [8, 0], sizes = [24, 128], strides = [1, 1]} : vector<32x128xf32> to vector<24x128xf32>
    %237 = vector.extract_strided_slice %232 {offsets = [24, 0], sizes = [8, 128], strides = [1, 1]} : vector<32x128xf32> to vector<8x128xf32>
    %238 = tpu.concatenate %236, %237 in 0 : vector<24x128xf32>, vector<8x128xf32> -> vector<32x128xf32>
    %239 = arith.minimumf %235, %238 : vector<32x128xf32>
    %240 = vector.extract_strided_slice %232 {offsets = [0, 0], sizes = [1, 128], strides = [1, 1]} : vector<32x128xf32> to vector<1x128xf32>
    %241 = vector.extract_strided_slice %232 {offsets = [0, 0], sizes = [31, 128], strides = [1, 1]} : vector<32x128xf32> to vector<31x128xf32>
    %242 = tpu.concatenate %240, %241 in 0 : vector<1x128xf32>, vector<31x128xf32> -> vector<32x128xf32>
    %243 = arith.select %19, %232, %242 : vector<32x128xi1>, vector<32x128xf32>
    %244 = vector.extract_strided_slice %232 {offsets = [1, 0], sizes = [31, 128], strides = [1, 1]} : vector<32x128xf32> to vector<31x128xf32>
    %245 = vector.extract_strided_slice %232 {offsets = [31, 0], sizes = [1, 128], strides = [1, 1]} : vector<32x128xf32> to vector<1x128xf32>
    %246 = tpu.concatenate %244, %245 in 0 : vector<31x128xf32>, vector<1x128xf32> -> vector<32x128xf32>
    %247 = arith.select %37, %232, %246 : vector<32x128xi1>, vector<32x128xf32>
    %248 = arith.minimumf %243, %247 : vector<32x128xf32>
    %c1_i32_40 = arith.constant 1 : i32
    %249 = tpu.dynamic_rotate %232 by %c1_i32_40 dim 1 : vector<32x128xf32>, i32 -> vector<32x128xf32>
    %250 = arith.select %55, %232, %249 : vector<32x128xi1>, vector<32x128xf32>
    %c127_i32_41 = arith.constant 127 : i32
    %251 = tpu.dynamic_rotate %232 by %c127_i32_41 dim 1 : vector<32x128xf32>, i32 -> vector<32x128xf32>
    %252 = arith.select %73, %232, %251 : vector<32x128xi1>, vector<32x128xf32>
    %253 = arith.minimumf %250, %252 : vector<32x128xf32>
    %254 = arith.minimumf %239, %248 : vector<32x128xf32>
    %255 = arith.minimumf %253, %232 : vector<32x128xf32>
    %256 = arith.minimumf %254, %255 : vector<32x128xf32>
    %257 = vector.extract_strided_slice %256 {offsets = [0, 0], sizes = [8, 128], strides = [1, 1]} : vector<32x128xf32> to vector<8x128xf32>
    %258 = vector.extract_strided_slice %256 {offsets = [0, 0], sizes = [24, 128], strides = [1, 1]} : vector<32x128xf32> to vector<24x128xf32>
    %259 = tpu.concatenate %257, %258 in 0 : vector<8x128xf32>, vector<24x128xf32> -> vector<32x128xf32>
    %260 = vector.extract_strided_slice %256 {offsets = [8, 0], sizes = [24, 128], strides = [1, 1]} : vector<32x128xf32> to vector<24x128xf32>
    %261 = vector.extract_strided_slice %256 {offsets = [24, 0], sizes = [8, 128], strides = [1, 1]} : vector<32x128xf32> to vector<8x128xf32>
    %262 = tpu.concatenate %260, %261 in 0 : vector<24x128xf32>, vector<8x128xf32> -> vector<32x128xf32>
    %263 = arith.maximumf %259, %262 : vector<32x128xf32>
    %264 = arith.maximumf %263, %256 : vector<32x128xf32>
    %265 = vector.extract_strided_slice %264 {offsets = [0, 0], sizes = [1, 128], strides = [1, 1]} : vector<32x128xf32> to vector<1x128xf32>
    %266 = vector.extract_strided_slice %264 {offsets = [0, 0], sizes = [31, 128], strides = [1, 1]} : vector<32x128xf32> to vector<31x128xf32>
    %267 = tpu.concatenate %265, %266 in 0 : vector<1x128xf32>, vector<31x128xf32> -> vector<32x128xf32>
    %268 = arith.select %19, %264, %267 : vector<32x128xi1>, vector<32x128xf32>
    %269 = vector.extract_strided_slice %264 {offsets = [1, 0], sizes = [31, 128], strides = [1, 1]} : vector<32x128xf32> to vector<31x128xf32>
    %270 = vector.extract_strided_slice %264 {offsets = [31, 0], sizes = [1, 128], strides = [1, 1]} : vector<32x128xf32> to vector<1x128xf32>
    %271 = tpu.concatenate %269, %270 in 0 : vector<31x128xf32>, vector<1x128xf32> -> vector<32x128xf32>
    %272 = arith.select %37, %264, %271 : vector<32x128xi1>, vector<32x128xf32>
    %273 = arith.maximumf %268, %272 : vector<32x128xf32>
    %274 = arith.maximumf %273, %264 : vector<32x128xf32>
    %c1_i32_42 = arith.constant 1 : i32
    %275 = tpu.dynamic_rotate %274 by %c1_i32_42 dim 1 : vector<32x128xf32>, i32 -> vector<32x128xf32>
    %276 = arith.select %55, %274, %275 : vector<32x128xi1>, vector<32x128xf32>
    %c127_i32_43 = arith.constant 127 : i32
    %277 = tpu.dynamic_rotate %274 by %c127_i32_43 dim 1 : vector<32x128xf32>, i32 -> vector<32x128xf32>
    %278 = arith.select %73, %274, %277 : vector<32x128xi1>, vector<32x128xf32>
    %279 = arith.maximumf %276, %278 : vector<32x128xf32>
    %280 = arith.maximumf %279, %274 : vector<32x128xf32>
    %281 = arith.subf %232, %280 : vector<32x128xf32>
    %cst_44 = arith.constant 0.000000e+00 : f32
    %282 = vector.broadcast %cst_44 : f32 to vector<32x128xf32>
    %283 = arith.maximumf %281, %282 : vector<32x128xf32>
    %284 = arith.mulf %208, %283 : vector<32x128xf32>
    %285 = arith.subf %283, %284 : vector<32x128xf32>
    %cst_45 = arith.constant 0.000000e+00 : f32
    %286 = vector.broadcast %cst_45 : f32 to vector<32x128xf32>
    %287 = arith.maximumf %285, %286 : vector<32x128xf32>
    %288 = arith.addf %208, %287 : vector<32x128xf32>
    %289 = vector.extract_strided_slice %232 {offsets = [0, 0], sizes = [8, 128], strides = [1, 1]} : vector<32x128xf32> to vector<8x128xf32>
    %290 = vector.extract_strided_slice %232 {offsets = [0, 0], sizes = [24, 128], strides = [1, 1]} : vector<32x128xf32> to vector<24x128xf32>
    %291 = tpu.concatenate %289, %290 in 0 : vector<8x128xf32>, vector<24x128xf32> -> vector<32x128xf32>
    %292 = vector.extract_strided_slice %232 {offsets = [8, 0], sizes = [24, 128], strides = [1, 1]} : vector<32x128xf32> to vector<24x128xf32>
    %293 = vector.extract_strided_slice %232 {offsets = [24, 0], sizes = [8, 128], strides = [1, 1]} : vector<32x128xf32> to vector<8x128xf32>
    %294 = tpu.concatenate %292, %293 in 0 : vector<24x128xf32>, vector<8x128xf32> -> vector<32x128xf32>
    %295 = arith.minimumf %291, %294 : vector<32x128xf32>
    %296 = vector.extract_strided_slice %232 {offsets = [0, 0], sizes = [1, 128], strides = [1, 1]} : vector<32x128xf32> to vector<1x128xf32>
    %297 = vector.extract_strided_slice %232 {offsets = [0, 0], sizes = [31, 128], strides = [1, 1]} : vector<32x128xf32> to vector<31x128xf32>
    %298 = tpu.concatenate %296, %297 in 0 : vector<1x128xf32>, vector<31x128xf32> -> vector<32x128xf32>
    %299 = arith.select %19, %232, %298 : vector<32x128xi1>, vector<32x128xf32>
    %300 = vector.extract_strided_slice %232 {offsets = [1, 0], sizes = [31, 128], strides = [1, 1]} : vector<32x128xf32> to vector<31x128xf32>
    %301 = vector.extract_strided_slice %232 {offsets = [31, 0], sizes = [1, 128], strides = [1, 1]} : vector<32x128xf32> to vector<1x128xf32>
    %302 = tpu.concatenate %300, %301 in 0 : vector<31x128xf32>, vector<1x128xf32> -> vector<32x128xf32>
    %303 = arith.select %37, %232, %302 : vector<32x128xi1>, vector<32x128xf32>
    %304 = arith.minimumf %299, %303 : vector<32x128xf32>
    %c1_i32_46 = arith.constant 1 : i32
    %305 = tpu.dynamic_rotate %232 by %c1_i32_46 dim 1 : vector<32x128xf32>, i32 -> vector<32x128xf32>
    %306 = arith.select %55, %232, %305 : vector<32x128xi1>, vector<32x128xf32>
    %c127_i32_47 = arith.constant 127 : i32
    %307 = tpu.dynamic_rotate %232 by %c127_i32_47 dim 1 : vector<32x128xf32>, i32 -> vector<32x128xf32>
    %308 = arith.select %73, %232, %307 : vector<32x128xi1>, vector<32x128xf32>
    %309 = arith.minimumf %306, %308 : vector<32x128xf32>
    %310 = arith.minimumf %295, %304 : vector<32x128xf32>
    %311 = arith.minimumf %309, %232 : vector<32x128xf32>
    %312 = arith.minimumf %310, %311 : vector<32x128xf32>
    %313 = vector.extract_strided_slice %312 {offsets = [0, 0], sizes = [8, 128], strides = [1, 1]} : vector<32x128xf32> to vector<8x128xf32>
    %314 = vector.extract_strided_slice %312 {offsets = [0, 0], sizes = [24, 128], strides = [1, 1]} : vector<32x128xf32> to vector<24x128xf32>
    %315 = tpu.concatenate %313, %314 in 0 : vector<8x128xf32>, vector<24x128xf32> -> vector<32x128xf32>
    %316 = vector.extract_strided_slice %312 {offsets = [8, 0], sizes = [24, 128], strides = [1, 1]} : vector<32x128xf32> to vector<24x128xf32>
    %317 = vector.extract_strided_slice %312 {offsets = [24, 0], sizes = [8, 128], strides = [1, 1]} : vector<32x128xf32> to vector<8x128xf32>
    %318 = tpu.concatenate %316, %317 in 0 : vector<24x128xf32>, vector<8x128xf32> -> vector<32x128xf32>
    %319 = arith.minimumf %315, %318 : vector<32x128xf32>
    %320 = vector.extract_strided_slice %312 {offsets = [0, 0], sizes = [1, 128], strides = [1, 1]} : vector<32x128xf32> to vector<1x128xf32>
    %321 = vector.extract_strided_slice %312 {offsets = [0, 0], sizes = [31, 128], strides = [1, 1]} : vector<32x128xf32> to vector<31x128xf32>
    %322 = tpu.concatenate %320, %321 in 0 : vector<1x128xf32>, vector<31x128xf32> -> vector<32x128xf32>
    %323 = arith.select %19, %312, %322 : vector<32x128xi1>, vector<32x128xf32>
    %324 = vector.extract_strided_slice %312 {offsets = [1, 0], sizes = [31, 128], strides = [1, 1]} : vector<32x128xf32> to vector<31x128xf32>
    %325 = vector.extract_strided_slice %312 {offsets = [31, 0], sizes = [1, 128], strides = [1, 1]} : vector<32x128xf32> to vector<1x128xf32>
    %326 = tpu.concatenate %324, %325 in 0 : vector<31x128xf32>, vector<1x128xf32> -> vector<32x128xf32>
    %327 = arith.select %37, %312, %326 : vector<32x128xi1>, vector<32x128xf32>
    %328 = arith.minimumf %323, %327 : vector<32x128xf32>
    %c1_i32_48 = arith.constant 1 : i32
    %329 = tpu.dynamic_rotate %312 by %c1_i32_48 dim 1 : vector<32x128xf32>, i32 -> vector<32x128xf32>
    %330 = arith.select %55, %312, %329 : vector<32x128xi1>, vector<32x128xf32>
    %c127_i32_49 = arith.constant 127 : i32
    %331 = tpu.dynamic_rotate %312 by %c127_i32_49 dim 1 : vector<32x128xf32>, i32 -> vector<32x128xf32>
    %332 = arith.select %73, %312, %331 : vector<32x128xi1>, vector<32x128xf32>
    %333 = arith.minimumf %330, %332 : vector<32x128xf32>
    %334 = arith.minimumf %319, %328 : vector<32x128xf32>
    %335 = arith.minimumf %333, %312 : vector<32x128xf32>
    %336 = arith.minimumf %334, %335 : vector<32x128xf32>
    %337 = vector.extract_strided_slice %336 {offsets = [0, 0], sizes = [8, 128], strides = [1, 1]} : vector<32x128xf32> to vector<8x128xf32>
    %338 = vector.extract_strided_slice %336 {offsets = [0, 0], sizes = [24, 128], strides = [1, 1]} : vector<32x128xf32> to vector<24x128xf32>
    %339 = tpu.concatenate %337, %338 in 0 : vector<8x128xf32>, vector<24x128xf32> -> vector<32x128xf32>
    %340 = vector.extract_strided_slice %336 {offsets = [8, 0], sizes = [24, 128], strides = [1, 1]} : vector<32x128xf32> to vector<24x128xf32>
    %341 = vector.extract_strided_slice %336 {offsets = [24, 0], sizes = [8, 128], strides = [1, 1]} : vector<32x128xf32> to vector<8x128xf32>
    %342 = tpu.concatenate %340, %341 in 0 : vector<24x128xf32>, vector<8x128xf32> -> vector<32x128xf32>
    %343 = arith.maximumf %339, %342 : vector<32x128xf32>
    %344 = arith.maximumf %343, %336 : vector<32x128xf32>
    %345 = vector.extract_strided_slice %344 {offsets = [0, 0], sizes = [1, 128], strides = [1, 1]} : vector<32x128xf32> to vector<1x128xf32>
    %346 = vector.extract_strided_slice %344 {offsets = [0, 0], sizes = [31, 128], strides = [1, 1]} : vector<32x128xf32> to vector<31x128xf32>
    %347 = tpu.concatenate %345, %346 in 0 : vector<1x128xf32>, vector<31x128xf32> -> vector<32x128xf32>
    %348 = arith.select %19, %344, %347 : vector<32x128xi1>, vector<32x128xf32>
    %349 = vector.extract_strided_slice %344 {offsets = [1, 0], sizes = [31, 128], strides = [1, 1]} : vector<32x128xf32> to vector<31x128xf32>
    %350 = vector.extract_strided_slice %344 {offsets = [31, 0], sizes = [1, 128], strides = [1, 1]} : vector<32x128xf32> to vector<1x128xf32>
    %351 = tpu.concatenate %349, %350 in 0 : vector<31x128xf32>, vector<1x128xf32> -> vector<32x128xf32>
    %352 = arith.select %37, %344, %351 : vector<32x128xi1>, vector<32x128xf32>
    %353 = arith.maximumf %348, %352 : vector<32x128xf32>
    %354 = arith.maximumf %353, %344 : vector<32x128xf32>
    %c1_i32_50 = arith.constant 1 : i32
    %355 = tpu.dynamic_rotate %354 by %c1_i32_50 dim 1 : vector<32x128xf32>, i32 -> vector<32x128xf32>
    %356 = arith.select %55, %354, %355 : vector<32x128xi1>, vector<32x128xf32>
    %c127_i32_51 = arith.constant 127 : i32
    %357 = tpu.dynamic_rotate %354 by %c127_i32_51 dim 1 : vector<32x128xf32>, i32 -> vector<32x128xf32>
    %358 = arith.select %73, %354, %357 : vector<32x128xi1>, vector<32x128xf32>
    %359 = arith.maximumf %356, %358 : vector<32x128xf32>
    %360 = arith.maximumf %359, %354 : vector<32x128xf32>
    %361 = arith.subf %312, %360 : vector<32x128xf32>
    %cst_52 = arith.constant 0.000000e+00 : f32
    %362 = vector.broadcast %cst_52 : f32 to vector<32x128xf32>
    %363 = arith.maximumf %361, %362 : vector<32x128xf32>
    %364 = arith.mulf %288, %363 : vector<32x128xf32>
    %365 = arith.subf %363, %364 : vector<32x128xf32>
    %cst_53 = arith.constant 0.000000e+00 : f32
    %366 = vector.broadcast %cst_53 : f32 to vector<32x128xf32>
    %367 = arith.maximumf %365, %366 : vector<32x128xf32>
    %368 = arith.addf %288, %367 : vector<32x128xf32>
    %369 = arith.mulf %368, %75 : vector<32x128xf32>
    %370 = vector.shape_cast %369 : vector<32x128xf32> to vector<1x32x128xf32>
    %cst_54 = arith.constant dense<0.000000e+00> : vector<1xf32>
    %371 = vector.multi_reduction <add>, %370, %cst_54 [1, 2] : vector<1x32x128xf32> to vector<1xf32>
    %372 = vector.shape_cast %371 : vector<1xf32> to vector<1x1x1xf32>
    %373 = vector.extract %372[0, 0, 0] : f32 from vector<1x1x1xf32>
    %374 = vector.shape_cast %368 : vector<32x128xf32> to vector<1x32x128xf32>
    %cst_55 = arith.constant dense<0.000000e+00> : vector<1xf32>
    %375 = vector.multi_reduction <add>, %374, %cst_55 [1, 2] : vector<1x32x128xf32> to vector<1xf32>
    %376 = vector.shape_cast %375 : vector<1xf32> to vector<1x1x1xf32>
    %377 = vector.extract %376[0, 0, 0] : f32 from vector<1x1x1xf32>
    %378 = vector.extract_strided_slice %75 {offsets = [0, 0], sizes = [8, 128], strides = [1, 1]} : vector<32x128xf32> to vector<8x128xf32>
    %379 = vector.extract_strided_slice %75 {offsets = [0, 0], sizes = [24, 128], strides = [1, 1]} : vector<32x128xf32> to vector<24x128xf32>
    %380 = tpu.concatenate %378, %379 in 0 : vector<8x128xf32>, vector<24x128xf32> -> vector<32x128xf32>
    %381 = vector.extract_strided_slice %75 {offsets = [8, 0], sizes = [24, 128], strides = [1, 1]} : vector<32x128xf32> to vector<24x128xf32>
    %382 = vector.extract_strided_slice %75 {offsets = [24, 0], sizes = [8, 128], strides = [1, 1]} : vector<32x128xf32> to vector<8x128xf32>
    %383 = tpu.concatenate %381, %382 in 0 : vector<24x128xf32>, vector<8x128xf32> -> vector<32x128xf32>
    %384 = arith.minimumf %380, %383 : vector<32x128xf32>
    %385 = vector.extract_strided_slice %75 {offsets = [0, 0], sizes = [1, 128], strides = [1, 1]} : vector<32x128xf32> to vector<1x128xf32>
    %386 = vector.extract_strided_slice %75 {offsets = [0, 0], sizes = [31, 128], strides = [1, 1]} : vector<32x128xf32> to vector<31x128xf32>
    %387 = tpu.concatenate %385, %386 in 0 : vector<1x128xf32>, vector<31x128xf32> -> vector<32x128xf32>
    %388 = arith.select %19, %75, %387 : vector<32x128xi1>, vector<32x128xf32>
    %389 = vector.extract_strided_slice %75 {offsets = [1, 0], sizes = [31, 128], strides = [1, 1]} : vector<32x128xf32> to vector<31x128xf32>
    %390 = vector.extract_strided_slice %75 {offsets = [31, 0], sizes = [1, 128], strides = [1, 1]} : vector<32x128xf32> to vector<1x128xf32>
    %391 = tpu.concatenate %389, %390 in 0 : vector<31x128xf32>, vector<1x128xf32> -> vector<32x128xf32>
    %392 = arith.select %37, %75, %391 : vector<32x128xi1>, vector<32x128xf32>
    %393 = arith.minimumf %388, %392 : vector<32x128xf32>
    %c1_i32_56 = arith.constant 1 : i32
    %394 = tpu.dynamic_rotate %75 by %c1_i32_56 dim 1 : vector<32x128xf32>, i32 -> vector<32x128xf32>
    %395 = arith.select %55, %75, %394 : vector<32x128xi1>, vector<32x128xf32>
    %c127_i32_57 = arith.constant 127 : i32
    %396 = tpu.dynamic_rotate %75 by %c127_i32_57 dim 1 : vector<32x128xf32>, i32 -> vector<32x128xf32>
    %397 = arith.select %73, %75, %396 : vector<32x128xi1>, vector<32x128xf32>
    %398 = arith.minimumf %395, %397 : vector<32x128xf32>
    %399 = arith.minimumf %384, %393 : vector<32x128xf32>
    %400 = arith.minimumf %398, %75 : vector<32x128xf32>
    %401 = arith.minimumf %399, %400 : vector<32x128xf32>
    %402 = vector.extract_strided_slice %401 {offsets = [0, 0], sizes = [8, 128], strides = [1, 1]} : vector<32x128xf32> to vector<8x128xf32>
    %403 = vector.extract_strided_slice %401 {offsets = [0, 0], sizes = [24, 128], strides = [1, 1]} : vector<32x128xf32> to vector<24x128xf32>
    %404 = tpu.concatenate %402, %403 in 0 : vector<8x128xf32>, vector<24x128xf32> -> vector<32x128xf32>
    %405 = vector.extract_strided_slice %401 {offsets = [8, 0], sizes = [24, 128], strides = [1, 1]} : vector<32x128xf32> to vector<24x128xf32>
    %406 = vector.extract_strided_slice %401 {offsets = [24, 0], sizes = [8, 128], strides = [1, 1]} : vector<32x128xf32> to vector<8x128xf32>
    %407 = tpu.concatenate %405, %406 in 0 : vector<24x128xf32>, vector<8x128xf32> -> vector<32x128xf32>
    %408 = arith.maximumf %404, %407 : vector<32x128xf32>
    %409 = arith.maximumf %408, %401 : vector<32x128xf32>
    %410 = vector.extract_strided_slice %409 {offsets = [0, 0], sizes = [1, 128], strides = [1, 1]} : vector<32x128xf32> to vector<1x128xf32>
    %411 = vector.extract_strided_slice %409 {offsets = [0, 0], sizes = [31, 128], strides = [1, 1]} : vector<32x128xf32> to vector<31x128xf32>
    %412 = tpu.concatenate %410, %411 in 0 : vector<1x128xf32>, vector<31x128xf32> -> vector<32x128xf32>
    %413 = arith.select %19, %409, %412 : vector<32x128xi1>, vector<32x128xf32>
    %414 = vector.extract_strided_slice %409 {offsets = [1, 0], sizes = [31, 128], strides = [1, 1]} : vector<32x128xf32> to vector<31x128xf32>
    %415 = vector.extract_strided_slice %409 {offsets = [31, 0], sizes = [1, 128], strides = [1, 1]} : vector<32x128xf32> to vector<1x128xf32>
    %416 = tpu.concatenate %414, %415 in 0 : vector<31x128xf32>, vector<1x128xf32> -> vector<32x128xf32>
    %417 = arith.select %37, %409, %416 : vector<32x128xi1>, vector<32x128xf32>
    %418 = arith.maximumf %413, %417 : vector<32x128xf32>
    %419 = arith.maximumf %418, %409 : vector<32x128xf32>
    %c1_i32_58 = arith.constant 1 : i32
    %420 = tpu.dynamic_rotate %419 by %c1_i32_58 dim 1 : vector<32x128xf32>, i32 -> vector<32x128xf32>
    %421 = arith.select %55, %419, %420 : vector<32x128xi1>, vector<32x128xf32>
    %c127_i32_59 = arith.constant 127 : i32
    %422 = tpu.dynamic_rotate %419 by %c127_i32_59 dim 1 : vector<32x128xf32>, i32 -> vector<32x128xf32>
    %423 = arith.select %73, %419, %422 : vector<32x128xi1>, vector<32x128xf32>
    %424 = arith.maximumf %421, %423 : vector<32x128xf32>
    %425 = arith.maximumf %424, %419 : vector<32x128xf32>
    %426 = arith.subf %75, %425 : vector<32x128xf32>
    %cst_60 = arith.constant 0.000000e+00 : f32
    %427 = vector.broadcast %cst_60 : f32 to vector<32x128xf32>
    %428 = arith.maximumf %426, %427 : vector<32x128xf32>
    %429 = vector.extract_strided_slice %75 {offsets = [0, 0], sizes = [8, 128], strides = [1, 1]} : vector<32x128xf32> to vector<8x128xf32>
    %430 = vector.extract_strided_slice %75 {offsets = [0, 0], sizes = [24, 128], strides = [1, 1]} : vector<32x128xf32> to vector<24x128xf32>
    %431 = tpu.concatenate %429, %430 in 0 : vector<8x128xf32>, vector<24x128xf32> -> vector<32x128xf32>
    %432 = vector.extract_strided_slice %75 {offsets = [8, 0], sizes = [24, 128], strides = [1, 1]} : vector<32x128xf32> to vector<24x128xf32>
    %433 = vector.extract_strided_slice %75 {offsets = [24, 0], sizes = [8, 128], strides = [1, 1]} : vector<32x128xf32> to vector<8x128xf32>
    %434 = tpu.concatenate %432, %433 in 0 : vector<24x128xf32>, vector<8x128xf32> -> vector<32x128xf32>
    %435 = arith.minimumf %431, %434 : vector<32x128xf32>
    %436 = vector.extract_strided_slice %75 {offsets = [0, 0], sizes = [1, 128], strides = [1, 1]} : vector<32x128xf32> to vector<1x128xf32>
    %437 = vector.extract_strided_slice %75 {offsets = [0, 0], sizes = [31, 128], strides = [1, 1]} : vector<32x128xf32> to vector<31x128xf32>
    %438 = tpu.concatenate %436, %437 in 0 : vector<1x128xf32>, vector<31x128xf32> -> vector<32x128xf32>
    %439 = arith.select %19, %75, %438 : vector<32x128xi1>, vector<32x128xf32>
    %440 = vector.extract_strided_slice %75 {offsets = [1, 0], sizes = [31, 128], strides = [1, 1]} : vector<32x128xf32> to vector<31x128xf32>
    %441 = vector.extract_strided_slice %75 {offsets = [31, 0], sizes = [1, 128], strides = [1, 1]} : vector<32x128xf32> to vector<1x128xf32>
    %442 = tpu.concatenate %440, %441 in 0 : vector<31x128xf32>, vector<1x128xf32> -> vector<32x128xf32>
    %443 = arith.select %37, %75, %442 : vector<32x128xi1>, vector<32x128xf32>
    %444 = arith.minimumf %439, %443 : vector<32x128xf32>
    %c1_i32_61 = arith.constant 1 : i32
    %445 = tpu.dynamic_rotate %75 by %c1_i32_61 dim 1 : vector<32x128xf32>, i32 -> vector<32x128xf32>
    %446 = arith.select %55, %75, %445 : vector<32x128xi1>, vector<32x128xf32>
    %c127_i32_62 = arith.constant 127 : i32
    %447 = tpu.dynamic_rotate %75 by %c127_i32_62 dim 1 : vector<32x128xf32>, i32 -> vector<32x128xf32>
    %448 = arith.select %73, %75, %447 : vector<32x128xi1>, vector<32x128xf32>
    %449 = arith.minimumf %446, %448 : vector<32x128xf32>
    %450 = arith.minimumf %435, %444 : vector<32x128xf32>
    %451 = arith.minimumf %449, %75 : vector<32x128xf32>
    %452 = arith.minimumf %450, %451 : vector<32x128xf32>
    %453 = vector.extract_strided_slice %452 {offsets = [0, 0], sizes = [8, 128], strides = [1, 1]} : vector<32x128xf32> to vector<8x128xf32>
    %454 = vector.extract_strided_slice %452 {offsets = [0, 0], sizes = [24, 128], strides = [1, 1]} : vector<32x128xf32> to vector<24x128xf32>
    %455 = tpu.concatenate %453, %454 in 0 : vector<8x128xf32>, vector<24x128xf32> -> vector<32x128xf32>
    %456 = vector.extract_strided_slice %452 {offsets = [8, 0], sizes = [24, 128], strides = [1, 1]} : vector<32x128xf32> to vector<24x128xf32>
    %457 = vector.extract_strided_slice %452 {offsets = [24, 0], sizes = [8, 128], strides = [1, 1]} : vector<32x128xf32> to vector<8x128xf32>
    %458 = tpu.concatenate %456, %457 in 0 : vector<24x128xf32>, vector<8x128xf32> -> vector<32x128xf32>
    %459 = arith.minimumf %455, %458 : vector<32x128xf32>
    %460 = vector.extract_strided_slice %452 {offsets = [0, 0], sizes = [1, 128], strides = [1, 1]} : vector<32x128xf32> to vector<1x128xf32>
    %461 = vector.extract_strided_slice %452 {offsets = [0, 0], sizes = [31, 128], strides = [1, 1]} : vector<32x128xf32> to vector<31x128xf32>
    %462 = tpu.concatenate %460, %461 in 0 : vector<1x128xf32>, vector<31x128xf32> -> vector<32x128xf32>
    %463 = arith.select %19, %452, %462 : vector<32x128xi1>, vector<32x128xf32>
    %464 = vector.extract_strided_slice %452 {offsets = [1, 0], sizes = [31, 128], strides = [1, 1]} : vector<32x128xf32> to vector<31x128xf32>
    %465 = vector.extract_strided_slice %452 {offsets = [31, 0], sizes = [1, 128], strides = [1, 1]} : vector<32x128xf32> to vector<1x128xf32>
    %466 = tpu.concatenate %464, %465 in 0 : vector<31x128xf32>, vector<1x128xf32> -> vector<32x128xf32>
    %467 = arith.select %37, %452, %466 : vector<32x128xi1>, vector<32x128xf32>
    %468 = arith.minimumf %463, %467 : vector<32x128xf32>
    %c1_i32_63 = arith.constant 1 : i32
    %469 = tpu.dynamic_rotate %452 by %c1_i32_63 dim 1 : vector<32x128xf32>, i32 -> vector<32x128xf32>
    %470 = arith.select %55, %452, %469 : vector<32x128xi1>, vector<32x128xf32>
    %c127_i32_64 = arith.constant 127 : i32
    %471 = tpu.dynamic_rotate %452 by %c127_i32_64 dim 1 : vector<32x128xf32>, i32 -> vector<32x128xf32>
    %472 = arith.select %73, %452, %471 : vector<32x128xi1>, vector<32x128xf32>
    %473 = arith.minimumf %470, %472 : vector<32x128xf32>
    %474 = arith.minimumf %459, %468 : vector<32x128xf32>
    %475 = arith.minimumf %473, %452 : vector<32x128xf32>
    %476 = arith.minimumf %474, %475 : vector<32x128xf32>
    %477 = vector.extract_strided_slice %476 {offsets = [0, 0], sizes = [8, 128], strides = [1, 1]} : vector<32x128xf32> to vector<8x128xf32>
    %478 = vector.extract_strided_slice %476 {offsets = [0, 0], sizes = [24, 128], strides = [1, 1]} : vector<32x128xf32> to vector<24x128xf32>
    %479 = tpu.concatenate %477, %478 in 0 : vector<8x128xf32>, vector<24x128xf32> -> vector<32x128xf32>
    %480 = vector.extract_strided_slice %476 {offsets = [8, 0], sizes = [24, 128], strides = [1, 1]} : vector<32x128xf32> to vector<24x128xf32>
    %481 = vector.extract_strided_slice %476 {offsets = [24, 0], sizes = [8, 128], strides = [1, 1]} : vector<32x128xf32> to vector<8x128xf32>
    %482 = tpu.concatenate %480, %481 in 0 : vector<24x128xf32>, vector<8x128xf32> -> vector<32x128xf32>
    %483 = arith.maximumf %479, %482 : vector<32x128xf32>
    %484 = arith.maximumf %483, %476 : vector<32x128xf32>
    %485 = vector.extract_strided_slice %484 {offsets = [0, 0], sizes = [1, 128], strides = [1, 1]} : vector<32x128xf32> to vector<1x128xf32>
    %486 = vector.extract_strided_slice %484 {offsets = [0, 0], sizes = [31, 128], strides = [1, 1]} : vector<32x128xf32> to vector<31x128xf32>
    %487 = tpu.concatenate %485, %486 in 0 : vector<1x128xf32>, vector<31x128xf32> -> vector<32x128xf32>
    %488 = arith.select %19, %484, %487 : vector<32x128xi1>, vector<32x128xf32>
    %489 = vector.extract_strided_slice %484 {offsets = [1, 0], sizes = [31, 128], strides = [1, 1]} : vector<32x128xf32> to vector<31x128xf32>
    %490 = vector.extract_strided_slice %484 {offsets = [31, 0], sizes = [1, 128], strides = [1, 1]} : vector<32x128xf32> to vector<1x128xf32>
    %491 = tpu.concatenate %489, %490 in 0 : vector<31x128xf32>, vector<1x128xf32> -> vector<32x128xf32>
    %492 = arith.select %37, %484, %491 : vector<32x128xi1>, vector<32x128xf32>
    %493 = arith.maximumf %488, %492 : vector<32x128xf32>
    %494 = arith.maximumf %493, %484 : vector<32x128xf32>
    %c1_i32_65 = arith.constant 1 : i32
    %495 = tpu.dynamic_rotate %494 by %c1_i32_65 dim 1 : vector<32x128xf32>, i32 -> vector<32x128xf32>
    %496 = arith.select %55, %494, %495 : vector<32x128xi1>, vector<32x128xf32>
    %c127_i32_66 = arith.constant 127 : i32
    %497 = tpu.dynamic_rotate %494 by %c127_i32_66 dim 1 : vector<32x128xf32>, i32 -> vector<32x128xf32>
    %498 = arith.select %73, %494, %497 : vector<32x128xi1>, vector<32x128xf32>
    %499 = arith.maximumf %496, %498 : vector<32x128xf32>
    %500 = arith.maximumf %499, %494 : vector<32x128xf32>
    %501 = arith.subf %452, %500 : vector<32x128xf32>
    %cst_67 = arith.constant 0.000000e+00 : f32
    %502 = vector.broadcast %cst_67 : f32 to vector<32x128xf32>
    %503 = arith.maximumf %501, %502 : vector<32x128xf32>
    %504 = arith.mulf %428, %503 : vector<32x128xf32>
    %505 = arith.subf %503, %504 : vector<32x128xf32>
    %cst_68 = arith.constant 0.000000e+00 : f32
    %506 = vector.broadcast %cst_68 : f32 to vector<32x128xf32>
    %507 = arith.maximumf %505, %506 : vector<32x128xf32>
    %508 = arith.addf %428, %507 : vector<32x128xf32>
    %509 = vector.extract_strided_slice %452 {offsets = [0, 0], sizes = [8, 128], strides = [1, 1]} : vector<32x128xf32> to vector<8x128xf32>
    %510 = vector.extract_strided_slice %452 {offsets = [0, 0], sizes = [24, 128], strides = [1, 1]} : vector<32x128xf32> to vector<24x128xf32>
    %511 = tpu.concatenate %509, %510 in 0 : vector<8x128xf32>, vector<24x128xf32> -> vector<32x128xf32>
    %512 = vector.extract_strided_slice %452 {offsets = [8, 0], sizes = [24, 128], strides = [1, 1]} : vector<32x128xf32> to vector<24x128xf32>
    %513 = vector.extract_strided_slice %452 {offsets = [24, 0], sizes = [8, 128], strides = [1, 1]} : vector<32x128xf32> to vector<8x128xf32>
    %514 = tpu.concatenate %512, %513 in 0 : vector<24x128xf32>, vector<8x128xf32> -> vector<32x128xf32>
    %515 = arith.minimumf %511, %514 : vector<32x128xf32>
    %516 = vector.extract_strided_slice %452 {offsets = [0, 0], sizes = [1, 128], strides = [1, 1]} : vector<32x128xf32> to vector<1x128xf32>
    %517 = vector.extract_strided_slice %452 {offsets = [0, 0], sizes = [31, 128], strides = [1, 1]} : vector<32x128xf32> to vector<31x128xf32>
    %518 = tpu.concatenate %516, %517 in 0 : vector<1x128xf32>, vector<31x128xf32> -> vector<32x128xf32>
    %519 = arith.select %19, %452, %518 : vector<32x128xi1>, vector<32x128xf32>
    %520 = vector.extract_strided_slice %452 {offsets = [1, 0], sizes = [31, 128], strides = [1, 1]} : vector<32x128xf32> to vector<31x128xf32>
    %521 = vector.extract_strided_slice %452 {offsets = [31, 0], sizes = [1, 128], strides = [1, 1]} : vector<32x128xf32> to vector<1x128xf32>
    %522 = tpu.concatenate %520, %521 in 0 : vector<31x128xf32>, vector<1x128xf32> -> vector<32x128xf32>
    %523 = arith.select %37, %452, %522 : vector<32x128xi1>, vector<32x128xf32>
    %524 = arith.minimumf %519, %523 : vector<32x128xf32>
    %c1_i32_69 = arith.constant 1 : i32
    %525 = tpu.dynamic_rotate %452 by %c1_i32_69 dim 1 : vector<32x128xf32>, i32 -> vector<32x128xf32>
    %526 = arith.select %55, %452, %525 : vector<32x128xi1>, vector<32x128xf32>
    %c127_i32_70 = arith.constant 127 : i32
    %527 = tpu.dynamic_rotate %452 by %c127_i32_70 dim 1 : vector<32x128xf32>, i32 -> vector<32x128xf32>
    %528 = arith.select %73, %452, %527 : vector<32x128xi1>, vector<32x128xf32>
    %529 = arith.minimumf %526, %528 : vector<32x128xf32>
    %530 = arith.minimumf %515, %524 : vector<32x128xf32>
    %531 = arith.minimumf %529, %452 : vector<32x128xf32>
    %532 = arith.minimumf %530, %531 : vector<32x128xf32>
    %533 = vector.extract_strided_slice %532 {offsets = [0, 0], sizes = [8, 128], strides = [1, 1]} : vector<32x128xf32> to vector<8x128xf32>
    %534 = vector.extract_strided_slice %532 {offsets = [0, 0], sizes = [24, 128], strides = [1, 1]} : vector<32x128xf32> to vector<24x128xf32>
    %535 = tpu.concatenate %533, %534 in 0 : vector<8x128xf32>, vector<24x128xf32> -> vector<32x128xf32>
    %536 = vector.extract_strided_slice %532 {offsets = [8, 0], sizes = [24, 128], strides = [1, 1]} : vector<32x128xf32> to vector<24x128xf32>
    %537 = vector.extract_strided_slice %532 {offsets = [24, 0], sizes = [8, 128], strides = [1, 1]} : vector<32x128xf32> to vector<8x128xf32>
    %538 = tpu.concatenate %536, %537 in 0 : vector<24x128xf32>, vector<8x128xf32> -> vector<32x128xf32>
    %539 = arith.minimumf %535, %538 : vector<32x128xf32>
    %540 = vector.extract_strided_slice %532 {offsets = [0, 0], sizes = [1, 128], strides = [1, 1]} : vector<32x128xf32> to vector<1x128xf32>
    %541 = vector.extract_strided_slice %532 {offsets = [0, 0], sizes = [31, 128], strides = [1, 1]} : vector<32x128xf32> to vector<31x128xf32>
    %542 = tpu.concatenate %540, %541 in 0 : vector<1x128xf32>, vector<31x128xf32> -> vector<32x128xf32>
    %543 = arith.select %19, %532, %542 : vector<32x128xi1>, vector<32x128xf32>
    %544 = vector.extract_strided_slice %532 {offsets = [1, 0], sizes = [31, 128], strides = [1, 1]} : vector<32x128xf32> to vector<31x128xf32>
    %545 = vector.extract_strided_slice %532 {offsets = [31, 0], sizes = [1, 128], strides = [1, 1]} : vector<32x128xf32> to vector<1x128xf32>
    %546 = tpu.concatenate %544, %545 in 0 : vector<31x128xf32>, vector<1x128xf32> -> vector<32x128xf32>
    %547 = arith.select %37, %532, %546 : vector<32x128xi1>, vector<32x128xf32>
    %548 = arith.minimumf %543, %547 : vector<32x128xf32>
    %c1_i32_71 = arith.constant 1 : i32
    %549 = tpu.dynamic_rotate %532 by %c1_i32_71 dim 1 : vector<32x128xf32>, i32 -> vector<32x128xf32>
    %550 = arith.select %55, %532, %549 : vector<32x128xi1>, vector<32x128xf32>
    %c127_i32_72 = arith.constant 127 : i32
    %551 = tpu.dynamic_rotate %532 by %c127_i32_72 dim 1 : vector<32x128xf32>, i32 -> vector<32x128xf32>
    %552 = arith.select %73, %532, %551 : vector<32x128xi1>, vector<32x128xf32>
    %553 = arith.minimumf %550, %552 : vector<32x128xf32>
    %554 = arith.minimumf %539, %548 : vector<32x128xf32>
    %555 = arith.minimumf %553, %532 : vector<32x128xf32>
    %556 = arith.minimumf %554, %555 : vector<32x128xf32>
    %557 = vector.extract_strided_slice %556 {offsets = [0, 0], sizes = [8, 128], strides = [1, 1]} : vector<32x128xf32> to vector<8x128xf32>
    %558 = vector.extract_strided_slice %556 {offsets = [0, 0], sizes = [24, 128], strides = [1, 1]} : vector<32x128xf32> to vector<24x128xf32>
    %559 = tpu.concatenate %557, %558 in 0 : vector<8x128xf32>, vector<24x128xf32> -> vector<32x128xf32>
    %560 = vector.extract_strided_slice %556 {offsets = [8, 0], sizes = [24, 128], strides = [1, 1]} : vector<32x128xf32> to vector<24x128xf32>
    %561 = vector.extract_strided_slice %556 {offsets = [24, 0], sizes = [8, 128], strides = [1, 1]} : vector<32x128xf32> to vector<8x128xf32>
    %562 = tpu.concatenate %560, %561 in 0 : vector<24x128xf32>, vector<8x128xf32> -> vector<32x128xf32>
    %563 = arith.maximumf %559, %562 : vector<32x128xf32>
    %564 = arith.maximumf %563, %556 : vector<32x128xf32>
    %565 = vector.extract_strided_slice %564 {offsets = [0, 0], sizes = [1, 128], strides = [1, 1]} : vector<32x128xf32> to vector<1x128xf32>
    %566 = vector.extract_strided_slice %564 {offsets = [0, 0], sizes = [31, 128], strides = [1, 1]} : vector<32x128xf32> to vector<31x128xf32>
    %567 = tpu.concatenate %565, %566 in 0 : vector<1x128xf32>, vector<31x128xf32> -> vector<32x128xf32>
    %568 = arith.select %19, %564, %567 : vector<32x128xi1>, vector<32x128xf32>
    %569 = vector.extract_strided_slice %564 {offsets = [1, 0], sizes = [31, 128], strides = [1, 1]} : vector<32x128xf32> to vector<31x128xf32>
    %570 = vector.extract_strided_slice %564 {offsets = [31, 0], sizes = [1, 128], strides = [1, 1]} : vector<32x128xf32> to vector<1x128xf32>
    %571 = tpu.concatenate %569, %570 in 0 : vector<31x128xf32>, vector<1x128xf32> -> vector<32x128xf32>
    %572 = arith.select %37, %564, %571 : vector<32x128xi1>, vector<32x128xf32>
    %573 = arith.maximumf %568, %572 : vector<32x128xf32>
    %574 = arith.maximumf %573, %564 : vector<32x128xf32>
    %c1_i32_73 = arith.constant 1 : i32
    %575 = tpu.dynamic_rotate %574 by %c1_i32_73 dim 1 : vector<32x128xf32>, i32 -> vector<32x128xf32>
    %576 = arith.select %55, %574, %575 : vector<32x128xi1>, vector<32x128xf32>
    %c127_i32_74 = arith.constant 127 : i32
    %577 = tpu.dynamic_rotate %574 by %c127_i32_74 dim 1 : vector<32x128xf32>, i32 -> vector<32x128xf32>
    %578 = arith.select %73, %574, %577 : vector<32x128xi1>, vector<32x128xf32>
    %579 = arith.maximumf %576, %578 : vector<32x128xf32>
    %580 = arith.maximumf %579, %574 : vector<32x128xf32>
    %581 = arith.subf %532, %580 : vector<32x128xf32>
    %cst_75 = arith.constant 0.000000e+00 : f32
    %582 = vector.broadcast %cst_75 : f32 to vector<32x128xf32>
    %583 = arith.maximumf %581, %582 : vector<32x128xf32>
    %584 = arith.mulf %508, %583 : vector<32x128xf32>
    %585 = arith.subf %583, %584 : vector<32x128xf32>
    %cst_76 = arith.constant 0.000000e+00 : f32
    %586 = vector.broadcast %cst_76 : f32 to vector<32x128xf32>
    %587 = arith.maximumf %585, %586 : vector<32x128xf32>
    %588 = arith.addf %508, %587 : vector<32x128xf32>
    %589 = vector.extract_strided_slice %532 {offsets = [0, 0], sizes = [8, 128], strides = [1, 1]} : vector<32x128xf32> to vector<8x128xf32>
    %590 = vector.extract_strided_slice %532 {offsets = [0, 0], sizes = [24, 128], strides = [1, 1]} : vector<32x128xf32> to vector<24x128xf32>
    %591 = tpu.concatenate %589, %590 in 0 : vector<8x128xf32>, vector<24x128xf32> -> vector<32x128xf32>
    %592 = vector.extract_strided_slice %532 {offsets = [8, 0], sizes = [24, 128], strides = [1, 1]} : vector<32x128xf32> to vector<24x128xf32>
    %593 = vector.extract_strided_slice %532 {offsets = [24, 0], sizes = [8, 128], strides = [1, 1]} : vector<32x128xf32> to vector<8x128xf32>
    %594 = tpu.concatenate %592, %593 in 0 : vector<24x128xf32>, vector<8x128xf32> -> vector<32x128xf32>
    %595 = arith.minimumf %591, %594 : vector<32x128xf32>
    %596 = vector.extract_strided_slice %532 {offsets = [0, 0], sizes = [1, 128], strides = [1, 1]} : vector<32x128xf32> to vector<1x128xf32>
    %597 = vector.extract_strided_slice %532 {offsets = [0, 0], sizes = [31, 128], strides = [1, 1]} : vector<32x128xf32> to vector<31x128xf32>
    %598 = tpu.concatenate %596, %597 in 0 : vector<1x128xf32>, vector<31x128xf32> -> vector<32x128xf32>
    %599 = arith.select %19, %532, %598 : vector<32x128xi1>, vector<32x128xf32>
    %600 = vector.extract_strided_slice %532 {offsets = [1, 0], sizes = [31, 128], strides = [1, 1]} : vector<32x128xf32> to vector<31x128xf32>
    %601 = vector.extract_strided_slice %532 {offsets = [31, 0], sizes = [1, 128], strides = [1, 1]} : vector<32x128xf32> to vector<1x128xf32>
    %602 = tpu.concatenate %600, %601 in 0 : vector<31x128xf32>, vector<1x128xf32> -> vector<32x128xf32>
    %603 = arith.select %37, %532, %602 : vector<32x128xi1>, vector<32x128xf32>
    %604 = arith.minimumf %599, %603 : vector<32x128xf32>
    %c1_i32_77 = arith.constant 1 : i32
    %605 = tpu.dynamic_rotate %532 by %c1_i32_77 dim 1 : vector<32x128xf32>, i32 -> vector<32x128xf32>
    %606 = arith.select %55, %532, %605 : vector<32x128xi1>, vector<32x128xf32>
    %c127_i32_78 = arith.constant 127 : i32
    %607 = tpu.dynamic_rotate %532 by %c127_i32_78 dim 1 : vector<32x128xf32>, i32 -> vector<32x128xf32>
    %608 = arith.select %73, %532, %607 : vector<32x128xi1>, vector<32x128xf32>
    %609 = arith.minimumf %606, %608 : vector<32x128xf32>
    %610 = arith.minimumf %595, %604 : vector<32x128xf32>
    %611 = arith.minimumf %609, %532 : vector<32x128xf32>
    %612 = arith.minimumf %610, %611 : vector<32x128xf32>
    %613 = vector.extract_strided_slice %612 {offsets = [0, 0], sizes = [8, 128], strides = [1, 1]} : vector<32x128xf32> to vector<8x128xf32>
    %614 = vector.extract_strided_slice %612 {offsets = [0, 0], sizes = [24, 128], strides = [1, 1]} : vector<32x128xf32> to vector<24x128xf32>
    %615 = tpu.concatenate %613, %614 in 0 : vector<8x128xf32>, vector<24x128xf32> -> vector<32x128xf32>
    %616 = vector.extract_strided_slice %612 {offsets = [8, 0], sizes = [24, 128], strides = [1, 1]} : vector<32x128xf32> to vector<24x128xf32>
    %617 = vector.extract_strided_slice %612 {offsets = [24, 0], sizes = [8, 128], strides = [1, 1]} : vector<32x128xf32> to vector<8x128xf32>
    %618 = tpu.concatenate %616, %617 in 0 : vector<24x128xf32>, vector<8x128xf32> -> vector<32x128xf32>
    %619 = arith.minimumf %615, %618 : vector<32x128xf32>
    %620 = vector.extract_strided_slice %612 {offsets = [0, 0], sizes = [1, 128], strides = [1, 1]} : vector<32x128xf32> to vector<1x128xf32>
    %621 = vector.extract_strided_slice %612 {offsets = [0, 0], sizes = [31, 128], strides = [1, 1]} : vector<32x128xf32> to vector<31x128xf32>
    %622 = tpu.concatenate %620, %621 in 0 : vector<1x128xf32>, vector<31x128xf32> -> vector<32x128xf32>
    %623 = arith.select %19, %612, %622 : vector<32x128xi1>, vector<32x128xf32>
    %624 = vector.extract_strided_slice %612 {offsets = [1, 0], sizes = [31, 128], strides = [1, 1]} : vector<32x128xf32> to vector<31x128xf32>
    %625 = vector.extract_strided_slice %612 {offsets = [31, 0], sizes = [1, 128], strides = [1, 1]} : vector<32x128xf32> to vector<1x128xf32>
    %626 = tpu.concatenate %624, %625 in 0 : vector<31x128xf32>, vector<1x128xf32> -> vector<32x128xf32>
    %627 = arith.select %37, %612, %626 : vector<32x128xi1>, vector<32x128xf32>
    %628 = arith.minimumf %623, %627 : vector<32x128xf32>
    %c1_i32_79 = arith.constant 1 : i32
    %629 = tpu.dynamic_rotate %612 by %c1_i32_79 dim 1 : vector<32x128xf32>, i32 -> vector<32x128xf32>
    %630 = arith.select %55, %612, %629 : vector<32x128xi1>, vector<32x128xf32>
    %c127_i32_80 = arith.constant 127 : i32
    %631 = tpu.dynamic_rotate %612 by %c127_i32_80 dim 1 : vector<32x128xf32>, i32 -> vector<32x128xf32>
    %632 = arith.select %73, %612, %631 : vector<32x128xi1>, vector<32x128xf32>
    %633 = arith.minimumf %630, %632 : vector<32x128xf32>
    %634 = arith.minimumf %619, %628 : vector<32x128xf32>
    %635 = arith.minimumf %633, %612 : vector<32x128xf32>
    %636 = arith.minimumf %634, %635 : vector<32x128xf32>
    %637 = vector.extract_strided_slice %636 {offsets = [0, 0], sizes = [8, 128], strides = [1, 1]} : vector<32x128xf32> to vector<8x128xf32>
    %638 = vector.extract_strided_slice %636 {offsets = [0, 0], sizes = [24, 128], strides = [1, 1]} : vector<32x128xf32> to vector<24x128xf32>
    %639 = tpu.concatenate %637, %638 in 0 : vector<8x128xf32>, vector<24x128xf32> -> vector<32x128xf32>
    %640 = vector.extract_strided_slice %636 {offsets = [8, 0], sizes = [24, 128], strides = [1, 1]} : vector<32x128xf32> to vector<24x128xf32>
    %641 = vector.extract_strided_slice %636 {offsets = [24, 0], sizes = [8, 128], strides = [1, 1]} : vector<32x128xf32> to vector<8x128xf32>
    %642 = tpu.concatenate %640, %641 in 0 : vector<24x128xf32>, vector<8x128xf32> -> vector<32x128xf32>
    %643 = arith.maximumf %639, %642 : vector<32x128xf32>
    %644 = arith.maximumf %643, %636 : vector<32x128xf32>
    %645 = vector.extract_strided_slice %644 {offsets = [0, 0], sizes = [1, 128], strides = [1, 1]} : vector<32x128xf32> to vector<1x128xf32>
    %646 = vector.extract_strided_slice %644 {offsets = [0, 0], sizes = [31, 128], strides = [1, 1]} : vector<32x128xf32> to vector<31x128xf32>
    %647 = tpu.concatenate %645, %646 in 0 : vector<1x128xf32>, vector<31x128xf32> -> vector<32x128xf32>
    %648 = arith.select %19, %644, %647 : vector<32x128xi1>, vector<32x128xf32>
    %649 = vector.extract_strided_slice %644 {offsets = [1, 0], sizes = [31, 128], strides = [1, 1]} : vector<32x128xf32> to vector<31x128xf32>
    %650 = vector.extract_strided_slice %644 {offsets = [31, 0], sizes = [1, 128], strides = [1, 1]} : vector<32x128xf32> to vector<1x128xf32>
    %651 = tpu.concatenate %649, %650 in 0 : vector<31x128xf32>, vector<1x128xf32> -> vector<32x128xf32>
    %652 = arith.select %37, %644, %651 : vector<32x128xi1>, vector<32x128xf32>
    %653 = arith.maximumf %648, %652 : vector<32x128xf32>
    %654 = arith.maximumf %653, %644 : vector<32x128xf32>
    %c1_i32_81 = arith.constant 1 : i32
    %655 = tpu.dynamic_rotate %654 by %c1_i32_81 dim 1 : vector<32x128xf32>, i32 -> vector<32x128xf32>
    %656 = arith.select %55, %654, %655 : vector<32x128xi1>, vector<32x128xf32>
    %c127_i32_82 = arith.constant 127 : i32
    %657 = tpu.dynamic_rotate %654 by %c127_i32_82 dim 1 : vector<32x128xf32>, i32 -> vector<32x128xf32>
    %658 = arith.select %73, %654, %657 : vector<32x128xi1>, vector<32x128xf32>
    %659 = arith.maximumf %656, %658 : vector<32x128xf32>
    %660 = arith.maximumf %659, %654 : vector<32x128xf32>
    %661 = arith.subf %612, %660 : vector<32x128xf32>
    %cst_83 = arith.constant 0.000000e+00 : f32
    %662 = vector.broadcast %cst_83 : f32 to vector<32x128xf32>
    %663 = arith.maximumf %661, %662 : vector<32x128xf32>
    %664 = arith.mulf %588, %663 : vector<32x128xf32>
    %665 = arith.subf %663, %664 : vector<32x128xf32>
    %cst_84 = arith.constant 0.000000e+00 : f32
    %666 = vector.broadcast %cst_84 : f32 to vector<32x128xf32>
    %667 = arith.maximumf %665, %666 : vector<32x128xf32>
    %668 = arith.addf %588, %667 : vector<32x128xf32>
    %669 = arith.mulf %668, %77 : vector<32x128xf32>
    %670 = vector.shape_cast %669 : vector<32x128xf32> to vector<1x32x128xf32>
    %cst_85 = arith.constant dense<0.000000e+00> : vector<1xf32>
    %671 = vector.multi_reduction <add>, %670, %cst_85 [1, 2] : vector<1x32x128xf32> to vector<1xf32>
    %672 = vector.shape_cast %671 : vector<1xf32> to vector<1x1x1xf32>
    %673 = vector.extract %672[0, 0, 0] : f32 from vector<1x1x1xf32>
    %674 = vector.shape_cast %668 : vector<32x128xf32> to vector<1x32x128xf32>
    %cst_86 = arith.constant dense<0.000000e+00> : vector<1xf32>
    %675 = vector.multi_reduction <add>, %674, %cst_86 [1, 2] : vector<1x32x128xf32> to vector<1xf32>
    %676 = vector.shape_cast %675 : vector<1xf32> to vector<1x1x1xf32>
    %677 = vector.extract %676[0, 0, 0] : f32 from vector<1x1x1xf32>
    %678 = vector.broadcast %373 : f32 to vector<1x128xf32>
    %c0_87 = arith.constant 0 : index
    %c0_88 = arith.constant 0 : index
    %679 = vector.load %arg3[%c0_87, %c0_88] : memref<1x128xf32, #tpu.memory_space<vmem>>, vector<1x128xf32>
    tpu.vector_store %arg3[%c0_87, %c0_88], %678 {strides = array<i32>} : memref<1x128xf32, #tpu.memory_space<vmem>>, vector<1x128xf32>,
    %680 = vector.broadcast %377 : f32 to vector<1x128xf32>
    %c0_89 = arith.constant 0 : index
    %c0_90 = arith.constant 0 : index
    %681 = vector.load %arg4[%c0_89, %c0_90] : memref<1x128xf32, #tpu.memory_space<vmem>>, vector<1x128xf32>
    tpu.vector_store %arg4[%c0_89, %c0_90], %680 {strides = array<i32>} : memref<1x128xf32, #tpu.memory_space<vmem>>, vector<1x128xf32>,
    %682 = vector.broadcast %673 : f32 to vector<1x128xf32>
    %c0_91 = arith.constant 0 : index
    %c0_92 = arith.constant 0 : index
    %683 = vector.load %arg5[%c0_91, %c0_92] : memref<1x128xf32, #tpu.memory_space<vmem>>, vector<1x128xf32>
    tpu.vector_store %arg5[%c0_91, %c0_92], %682 {strides = array<i32>} : memref<1x128xf32, #tpu.memory_space<vmem>>, vector<1x128xf32>,
    %684 = vector.broadcast %677 : f32 to vector<1x128xf32>
    %c0_93 = arith.constant 0 : index
    %c0_94 = arith.constant 0 : index
    %685 = vector.load %arg6[%c0_93, %c0_94] : memref<1x128xf32, #tpu.memory_space<vmem>>, vector<1x128xf32>
    tpu.vector_store %arg6[%c0_93, %c0_94], %684 {strides = array<i32>} : memref<1x128xf32, #tpu.memory_space<vmem>>, vector<1x128xf32>,
    return
  }
  func.func @transform_0(%arg0: i32) -> (i32, i32, i32) {
    %c0_i32 = arith.constant 0 : i32
    %c0_i32_0 = arith.constant 0 : i32
    %c0_i32_1 = arith.constant 0 : i32
    return %arg0, %c0_i32, %c0_i32_0 : i32, i32, i32
  }
  func.func @transform_1(%arg0: i32) -> (i32, i32, i32) {
    %c0_i32 = arith.constant 0 : i32
    %c0_i32_0 = arith.constant 0 : i32
    %c0_i32_1 = arith.constant 0 : i32
    return %arg0, %c0_i32, %c0_i32_0 : i32, i32, i32
  }
  func.func @transform_2(%arg0: i32) -> (i32, i32) {
    %c0_i32 = arith.constant 0 : i32
    %c0_i32_0 = arith.constant 0 : i32
    return %arg0, %c0_i32 : i32, i32
  }
  func.func @transform_3(%arg0: i32) -> (i32, i32) {
    %c0_i32 = arith.constant 0 : i32
    %c0_i32_0 = arith.constant 0 : i32
    return %arg0, %c0_i32 : i32, i32
  }
  func.func @transform_4(%arg0: i32) -> (i32, i32) {
    %c0_i32 = arith.constant 0 : i32
    %c0_i32_0 = arith.constant 0 : i32
    return %arg0, %c0_i32 : i32, i32
  }
  func.func @transform_5(%arg0: i32) -> (i32, i32) {
    %c0_i32 = arith.constant 0 : i32
    %c0_i32_0 = arith.constant 0 : i32
    return %arg0, %c0_i32 : i32, i32
  }
}

</mosaic_0001>

<llo_original>
// kernel: tpu_custom_call.1
$region0: #{tpu_custom_call.1}
  #allocation0 [shape = 'u32[]', space=smem, size = 0x4, offset = 0x4, fixed_abs, tag = 'smem constant byte address 0x4 - core index']
  #allocation1 [shape = 'u32[144,128]{1,0:T(1,128)}', space=vmem, size = 0x12000, scoped, tag = 'internal scratch']
  %s0 = inlined_call_operand.hbm [shape: f32[1,32,128], index: 0, kind: input, shape index: {}]
  %s1 = inlined_call_operand.hbm [shape: f32[1,32,128], index: 1, kind: input, shape index: {}]
  %s2 = inlined_call_operand.hbm [shape: f32[1,128], index: 2, kind: output, shape index: {0}]
  %s3 = inlined_call_operand.hbm [shape: f32[1,128], index: 3, kind: output, shape index: {1}]
  %s4 = inlined_call_operand.hbm [shape: f32[1,128], index: 4, kind: output, shape index: {2}]
  %s5 = inlined_call_operand.hbm [shape: f32[1,128], index: 5, kind: output, shape index: {3}]
  %6 = xla_tuple %s2, %s3, %s4, %s5
  %s7 = sld [smem:[#allocation0]]
  $region50: #{tpu_custom_call.1} parent=0
    _
  %s9 = ssub.s32 1, %s7
  %s10 = scalar_select 0, %s9, %s7
  $region1: #{tpu_custom_call.1} parent=0
    #allocation2 [shape = 'u8[16384]{0}', space=vmem, size = 0x4000, scoped, tag = 'input window, operand 0, single buffered']
    #allocation3 [shape = 's32[1]{0}', space=sflag, size = 0x4, scoped, tag = 'scoped memory for tpu_custom_call.1']
    #allocation4 [shape = 's32[1]{0}', space=sflag, size = 0x4, scoped, tag = 'scoped memory for tpu_custom_call.1']
    #allocation5 [shape = 'u8[16384]{0}', space=vmem, size = 0x4000, scoped, tag = 'input window, operand 1, single buffered']
    #allocation6 [shape = 's32[1]{0}', space=sflag, size = 0x4, scoped, tag = 'scoped memory for tpu_custom_call.1']
    #allocation7 [shape = 'u8[512]{0}', space=vmem, size = 0x400, scoped, tag = 'output window, operand 0, single buffered']
    #allocation8 [shape = 'u8[512]{0}', space=vmem, size = 0x400, scoped, tag = 'output window, operand 1, single buffered']
    #allocation9 [shape = 's32[1]{0}', space=sflag, size = 0x4, scoped, tag = 'scoped memory for tpu_custom_call.1']
    #allocation10 [shape = 'u8[512]{0}', space=vmem, size = 0x400, scoped, tag = 'output window, operand 2, single buffered']
    #allocation11 [shape = 'u8[512]{0}', space=vmem, size = 0x400, scoped, tag = 'output window, operand 3, single buffered']
    #allocation12 [shape = 's32[1]{0}', space=sflag, size = 0x4, scoped, tag = 'scoped memory for tpu_custom_call.1']
    %11 = vsyncpa [#allocation3], 0
    %12 = vsyncpa [#allocation6], 0
    %13 = vsyncpa [#allocation4], 0
    %14 = vsyncpa [#allocation9], 0
    %15 = vsyncpa [#allocation12], 0
    // Predicated region
    $region2: #{tpu_custom_call.1} parent=1 // pred_check
      _
    $region3: #{tpu_custom_call.1} parent=1 // pred_check_branch
      %17 = sbr.rel (0) target = $region5
    $region4: #{tpu_custom_call.1} parent=1 // pred_region
      %s19 = ssub.s32 512, 512
      %20 = vsyncadd [#allocation3], %s19
      %s21 = sshll.u32 [#allocation2], 4
      %s22 = int_to_ptr.vmem [resolvable:$true] %s21
      %27 = dma.hbm_to_vmem [thread:$0]  %s0, 512, %s22, [#allocation3], 128, 128, 8
    $region5: #{tpu_custom_call.1} parent=1 // pred_fallthru
      _
    // Predicated region
    $region6: #{tpu_custom_call.1} parent=1 // pred_check
      _
    $region7: #{tpu_custom_call.1} parent=1 // pred_check_branch
      %29 = sbr.rel (0) target = $region9
    $region8: #{tpu_custom_call.1} parent=1 // pred_region
      %s31 = ssub.s32 512, 512
      %32 = vsyncadd [#allocation6], %s31
      %s33 = sshll.u32 [#allocation5], 4
      %s34 = int_to_ptr.vmem [resolvable:$true] %s33
      %39 = dma.hbm_to_vmem [thread:$0]  %s1, 512, %s34, [#allocation6], 128, 128, 8
    $region9: #{tpu_custom_call.1} parent=1 // pred_fallthru
      _
    // Predicated region
    $region10: #{tpu_custom_call.1} parent=1 // pred_check
      _
    $region11: #{tpu_custom_call.1} parent=1 // pred_check_branch
      %41 = sbr.rel (0) target = $region13
    $region12: #{tpu_custom_call.1} parent=1 // pred_region
      %42 = dma.done [#allocation3], 512
    $region13: #{tpu_custom_call.1} parent=1 // pred_fallthru
      _
    // Predicated region
    $region14: #{tpu_custom_call.1} parent=1 // pred_check
      _
    $region15: #{tpu_custom_call.1} parent=1 // pred_check_branch
      %44 = sbr.rel (0) target = $region17
    $region16: #{tpu_custom_call.1} parent=1 // pred_region
      %45 = dma.done [#allocation6], 512
    $region17: #{tpu_custom_call.1} parent=1 // pred_fallthru
      _
    %v46 = vlaneseq
    %v47 = vshrl.u32 %v46, 7
    %v48 = vadd.s32 %v47, 8
    %v49 = vadd.s32 %v47, 16
    %v50 = vadd.s32 %v47, 24
    %v51 = vlaneseq
    %v52 = vand.u32 %v51, 127
    %vm53 = vcmp.lt.s32.totalorder %v47, 0
    %v54 = vsub.s32 0, %v47
    %v55 = vsel %vm53, %v54, %v47
    %v56 = vshrl.u32 %v55, 3
    %v57 = vand.u32 %v55, 7
    %v58 = vsub.s32 0, %v57
    %v59 = vsel %vm53, %v58, %v57
    %vm60 = vcmp.lt.s32.totalorder %v48, 0
    %v61 = vsub.s32 0, %v48
    %v62 = vsel %vm60, %v61, %v48
    %v63 = vshrl.u32 %v62, 3
    %v64 = vand.u32 %v62, 7
    %v65 = vsub.s32 0, %v64
    %v66 = vsel %vm60, %v65, %v64
    %vm67 = vcmp.lt.s32.totalorder %v49, 0
    %v68 = vsub.s32 0, %v49
    %v69 = vsel %vm67, %v68, %v49
    %v70 = vshrl.u32 %v69, 3
    %v71 = vand.u32 %v69, 7
    %v72 = vsub.s32 0, %v71
    %v73 = vsel %vm67, %v72, %v71
    %vm74 = vcmp.lt.s32.totalorder %v50, 0
    %v75 = vsub.s32 0, %v50
    %v76 = vsel %vm74, %v75, %v50
    %v77 = vshrl.u32 %v76, 3
    %v78 = vand.u32 %v76, 7
    %v79 = vsub.s32 0, %v78
    %v80 = vsel %vm74, %v79, %v78
    %vm81 = vcmp.ne.s32.totalorder %v59, 0
    %vm82 = vcmp.ne.s32.totalorder %v66, 0
    %vm83 = vcmp.ne.s32.totalorder %v73, 0
    %vm84 = vcmp.ne.s32.totalorder %v80, 0
    %vm85 = vcmp.lt.s32.totalorder %v59, 0
    %vm86 = vcmp.lt.s32.totalorder %v66, 0
    %vm87 = vcmp.lt.s32.totalorder %v73, 0
    %vm88 = vcmp.lt.s32.totalorder %v80, 0
    %vm89 = vmand %vm85, %vm81
    %vm90 = vmand %vm86, %vm82
    %vm91 = vmand %vm87, %vm83
    %vm92 = vmand %vm88, %vm84
    %v93 = vadd.s32 %v59, 8
    %v94 = vadd.s32 %v66, 8
    %v95 = vadd.s32 %v73, 8
    %v96 = vadd.s32 %v80, 8
    %v97 = vsel %vm89, %v93, %v59
    %v98 = vsel %vm90, %v94, %v66
    %v99 = vsel %vm91, %v95, %v73
    %v100 = vsel %vm92, %v96, %v80
    %vm101 = vcmp.eq.s32.totalorder %v97, 0
    %vm102 = vcmp.eq.s32.totalorder %v98, 0
    %vm103 = vcmp.eq.s32.totalorder %v99, 0
    %vm104 = vcmp.eq.s32.totalorder %v100, 0
    %vm105 = vcmp.eq.s32.totalorder %v97, 7
    %vm106 = vcmp.eq.s32.totalorder %v98, 7
    %vm107 = vcmp.eq.s32.totalorder %v99, 7
    %vm108 = vcmp.eq.s32.totalorder %v100, 7
    %vm109 = vcmp.lt.s32.totalorder %v52, 0
    %v110 = vsub.s32 0, %v52
    %v111 = vsel %vm109, %v110, %v52
    %v112 = vshrl.u32 %v111, 4
    %v113 = vand.u32 %v111, 15
    %v114 = vsub.s32 0, %v113
    %v115 = vsel %vm109, %v114, %v113
    %vm116 = vcmp.ne.s32.totalorder %v115, 0
    %vm117 = vcmp.lt.s32.totalorder %v115, 0
    %vm118 = vmand %vm117, %vm116
    %v119 = vadd.s32 %v115, 16
    %v120 = vsel %vm118, %v119, %v115
    %vm121 = vcmp.eq.s32.totalorder %v120, 0
    %vm122 = vcmp.eq.s32.totalorder %v120, 15
    %v123 = vld [vmem:[#allocation2] sm:$0xff]
    %v124 = vld [vmem:[#allocation2 + $0x8] sm:$0xff]
    %v125 = vld [vmem:[#allocation2 + $0x10] sm:$0xff]
    %v126 = vld [vmem:[#allocation2 + $0x18] sm:$0xff]
    %v127 = vld [vmem:[#allocation5] sm:$0xff]
    %v128 = vld [vmem:[#allocation5 + $0x8] sm:$0xff]
    %v129 = vld [vmem:[#allocation5 + $0x10] sm:$0xff]
    %v130 = vld [vmem:[#allocation5 + $0x18] sm:$0xff]
    %v131 = vmin.f32 %v127, %v128
    %v132 = vmin.f32 %v127, %v129
    %v133 = vmin.f32 %v128, %v130
    %v134 = vmin.f32 %v129, %v130
    %vm139 = vcmask 1040384
    %v140 = vrot.slane %v127, 7
    %v141 = vrot.slane %v128, 7
    %v142 = vsel %vm139, %v140, %v141
    %v143 = vrot.slane %v129, 7
    %v144 = vsel %vm139, %v141, %v143
    %v145 = vrot.slane %v130, 7
    %v146 = vsel %vm139, %v143, %v145
    %v151 = vsel %vm139, %v127, %v140
    %v152 = vsel %vm101, %v127, %v151
    %v153 = vsel %vm102, %v128, %v142
    %v154 = vsel %vm103, %v129, %v144
    %v155 = vsel %vm104, %v130, %v146
    %vm156 = vcmask 1046528
    %v157 = vrot.slane %v127, 1
    %v158 = vrot.slane %v128, 1
    %v159 = vsel %vm156, %v157, %v158
    %v160 = vrot.slane %v129, 1
    %v161 = vsel %vm156, %v158, %v160
    %v162 = vrot.slane %v130, 1
    %v163 = vsel %vm156, %v160, %v162
    %v168 = vsel %vm156, %v162, %v130
    %v169 = vsel %vm105, %v127, %v159
    %v170 = vsel %vm106, %v128, %v161
    %v171 = vsel %vm107, %v129, %v163
    %v172 = vsel %vm108, %v130, %v168
    %v173 = vmin.f32 %v152, %v169
    %v174 = vmin.f32 %v153, %v170
    %v175 = vmin.f32 %v154, %v171
    %v176 = vmin.f32 %v155, %v172
    %177 = vrot.lane.b32.xlu0 %v127, 1
    %v178 = vpop.permute.xlu0 %177
    %179 = vrot.lane.b32.xlu0 %v128, 1
    %v180 = vpop.permute.xlu0 %179
    %181 = vrot.lane.b32.xlu0 %v129, 1
    %v182 = vpop.permute.xlu0 %181
    %183 = vrot.lane.b32.xlu0 %v130, 1
    %v184 = vpop.permute.xlu0 %183
    %v185 = vsel %vm121, %v127, %v178
    %v186 = vsel %vm121, %v128, %v180
    %v187 = vsel %vm121, %v129, %v182
    %v188 = vsel %vm121, %v130, %v184
    %189 = vrot.lane.b32.xlu0 %v127, 127
    %v190 = vpop.permute.xlu0 %189
    %191 = vrot.lane.b32.xlu0 %v128, 127
    %v192 = vpop.permute.xlu0 %191
    %193 = vrot.lane.b32.xlu0 %v129, 127
    %v194 = vpop.permute.xlu0 %193
    %195 = vrot.lane.b32.xlu0 %v130, 127
    %v196 = vpop.permute.xlu0 %195
    %v197 = vsel %vm122, %v127, %v190
    %v198 = vsel %vm122, %v128, %v192
    %v199 = vsel %vm122, %v129, %v194
    %v200 = vsel %vm122, %v130, %v196
    %v201 = vmin.f32 %v185, %v197
    %v202 = vmin.f32 %v186, %v198
    %v203 = vmin.f32 %v187, %v199
    %v204 = vmin.f32 %v188, %v200
    %v205 = vmin.f32 %v131, %v173
    %v206 = vmin.f32 %v132, %v174
    %v207 = vmin.f32 %v133, %v175
    %v208 = vmin.f32 %v134, %v176
    %v209 = vmin.f32 %v201, %v127
    %v210 = vmin.f32 %v202, %v128
    %v211 = vmin.f32 %v203, %v129
    %v212 = vmin.f32 %v204, %v130
    %v213 = vmin.f32 %v205, %v209
    %v214 = vmin.f32 %v206, %v210
    %v215 = vmin.f32 %v207, %v211
    %v216 = vmin.f32 %v208, %v212
    %v217 = vmax.f32 %v213, %v214
    %v218 = vmax.f32 %v213, %v215
    %v219 = vmax.f32 %v214, %v216
    %v220 = vmax.f32 %v215, %v216
    %v221 = vmax.f32 %v217, %v213
    %v222 = vmax.f32 %v218, %v214
    %v223 = vmax.f32 %v219, %v215
    %v224 = vmax.f32 %v220, %v216
    %v229 = vrot.slane %v221, 7
    %v230 = vrot.slane %v222, 7
    %v231 = vsel %vm139, %v229, %v230
    %v232 = vrot.slane %v223, 7
    %v233 = vsel %vm139, %v230, %v232
    %v234 = vrot.slane %v224, 7
    %v235 = vsel %vm139, %v232, %v234
    %v240 = vsel %vm139, %v221, %v229
    %v241 = vsel %vm101, %v221, %v240
    %v242 = vsel %vm102, %v222, %v231
    %v243 = vsel %vm103, %v223, %v233
    %v244 = vsel %vm104, %v224, %v235
    %v245 = vrot.slane %v221, 1
    %v246 = vrot.slane %v222, 1
    %v247 = vsel %vm156, %v245, %v246
    %v248 = vrot.slane %v223, 1
    %v249 = vsel %vm156, %v246, %v248
    %v250 = vrot.slane %v224, 1
    %v251 = vsel %vm156, %v248, %v250
    %v256 = vsel %vm156, %v250, %v224
    %v257 = vsel %vm105, %v221, %v247
    %v258 = vsel %vm106, %v222, %v249
    %v259 = vsel %vm107, %v223, %v251
    %v260 = vsel %vm108, %v224, %v256
    %v261 = vmax.f32 %v241, %v257
    %v262 = vmax.f32 %v242, %v258
    %v263 = vmax.f32 %v243, %v259
    %v264 = vmax.f32 %v244, %v260
    %v265 = vmax.f32 %v261, %v221
    %v266 = vmax.f32 %v262, %v222
    %v267 = vmax.f32 %v263, %v223
    %v268 = vmax.f32 %v264, %v224
    %269 = vrot.lane.b32.xlu0 %v265, 1
    %v270 = vpop.permute.xlu0 %269
    %271 = vrot.lane.b32.xlu0 %v266, 1
    %v272 = vpop.permute.xlu0 %271
    %273 = vrot.lane.b32.xlu0 %v267, 1
    %v274 = vpop.permute.xlu0 %273
    %275 = vrot.lane.b32.xlu0 %v268, 1
    %v276 = vpop.permute.xlu0 %275
    %v277 = vsel %vm121, %v265, %v270
    %v278 = vsel %vm121, %v266, %v272
    %v279 = vsel %vm121, %v267, %v274
    %v280 = vsel %vm121, %v268, %v276
    %281 = vrot.lane.b32.xlu0 %v265, 127
    %v282 = vpop.permute.xlu0 %281
    %283 = vrot.lane.b32.xlu0 %v266, 127
    %v284 = vpop.permute.xlu0 %283
    %285 = vrot.lane.b32.xlu0 %v267, 127
    %v286 = vpop.permute.xlu0 %285
    %287 = vrot.lane.b32.xlu0 %v268, 127
    %v288 = vpop.permute.xlu0 %287
    %v289 = vsel %vm122, %v265, %v282
    %v290 = vsel %vm122, %v266, %v284
    %v291 = vsel %vm122, %v267, %v286
    %v292 = vsel %vm122, %v268, %v288
    %v293 = vmax.f32 %v277, %v289
    %v294 = vmax.f32 %v278, %v290
    %v295 = vmax.f32 %v279, %v291
    %v296 = vmax.f32 %v280, %v292
    %v297 = vmax.f32 %v293, %v265
    %v298 = vmax.f32 %v294, %v266
    %v299 = vmax.f32 %v295, %v267
    %v300 = vmax.f32 %v296, %v268
    %v301 = vsub.f32 %v127, %v297
    %v302 = vsub.f32 %v128, %v298
    %v303 = vsub.f32 %v129, %v299
    %v304 = vsub.f32 %v130, %v300
    %v305 = vmax.f32 %v301, 0.0
    %v306 = vmax.f32 %v302, 0.0
    %v307 = vmax.f32 %v303, 0.0
    %v308 = vmax.f32 %v304, 0.0
    %v309 = vmin.f32 %v213, %v214
    %v310 = vmin.f32 %v213, %v215
    %v311 = vmin.f32 %v214, %v216
    %v312 = vmin.f32 %v215, %v216
    %v317 = vrot.slane %v213, 7
    %v318 = vrot.slane %v214, 7
    %v319 = vsel %vm139, %v317, %v318
    %v320 = vrot.slane %v215, 7
    %v321 = vsel %vm139, %v318, %v320
    %v322 = vrot.slane %v216, 7
    %v323 = vsel %vm139, %v320, %v322
    %v328 = vsel %vm139, %v213, %v317
    %v329 = vsel %vm101, %v213, %v328
    %v330 = vsel %vm102, %v214, %v319
    %v331 = vsel %vm103, %v215, %v321
    %v332 = vsel %vm104, %v216, %v323
    %v333 = vrot.slane %v213, 1
    %v334 = vrot.slane %v214, 1
    %v335 = vsel %vm156, %v333, %v334
    %v336 = vrot.slane %v215, 1
    %v337 = vsel %vm156, %v334, %v336
    %v338 = vrot.slane %v216, 1
    %v339 = vsel %vm156, %v336, %v338
    %v344 = vsel %vm156, %v338, %v216
    %v345 = vsel %vm105, %v213, %v335
    %v346 = vsel %vm106, %v214, %v337
    %v347 = vsel %vm107, %v215, %v339
    %v348 = vsel %vm108, %v216, %v344
    %v349 = vmin.f32 %v329, %v345
    %v350 = vmin.f32 %v330, %v346
    %v351 = vmin.f32 %v331, %v347
    %v352 = vmin.f32 %v332, %v348
    %353 = vrot.lane.b32.xlu0 %v213, 1
    %v354 = vpop.permute.xlu0 %353
    %355 = vrot.lane.b32.xlu0 %v214, 1
    %v356 = vpop.permute.xlu0 %355
    %357 = vrot.lane.b32.xlu0 %v215, 1
    %v358 = vpop.permute.xlu0 %357
    %359 = vrot.lane.b32.xlu0 %v216, 1
    %v360 = vpop.permute.xlu0 %359
    %v361 = vsel %vm121, %v213, %v354
    %v362 = vsel %vm121, %v214, %v356
    %v363 = vsel %vm121, %v215, %v358
    %v364 = vsel %vm121, %v216, %v360
    %365 = vrot.lane.b32.xlu0 %v213, 127
    %v366 = vpop.permute.xlu0 %365
    %367 = vrot.lane.b32.xlu0 %v214, 127
    %v368 = vpop.permute.xlu0 %367
    %369 = vrot.lane.b32.xlu0 %v215, 127
    %v370 = vpop.permute.xlu0 %369
    %371 = vrot.lane.b32.xlu0 %v216, 127
    %v372 = vpop.permute.xlu0 %371
    %v373 = vsel %vm122, %v213, %v366
    %v374 = vsel %vm122, %v214, %v368
    %v375 = vsel %vm122, %v215, %v370
    %v376 = vsel %vm122, %v216, %v372
    %v377 = vmin.f32 %v361, %v373
    %v378 = vmin.f32 %v362, %v374
    %v379 = vmin.f32 %v363, %v375
    %v380 = vmin.f32 %v364, %v376
    %v381 = vmin.f32 %v309, %v349
    %v382 = vmin.f32 %v310, %v350
    %v383 = vmin.f32 %v311, %v351
    %v384 = vmin.f32 %v312, %v352
    %v385 = vmin.f32 %v377, %v213
    %v386 = vmin.f32 %v378, %v214
    %v387 = vmin.f32 %v379, %v215
    %v388 = vmin.f32 %v380, %v216
    %v389 = vmin.f32 %v381, %v385
    %v390 = vmin.f32 %v382, %v386
    %v391 = vmin.f32 %v383, %v387
    %v392 = vmin.f32 %v384, %v388
    %v393 = vmax.f32 %v389, %v390
    %v394 = vmax.f32 %v389, %v391
    %v395 = vmax.f32 %v390, %v392
    %v396 = vmax.f32 %v391, %v392
    %v397 = vmax.f32 %v393, %v389
    %v398 = vmax.f32 %v394, %v390
    %v399 = vmax.f32 %v395, %v391
    %v400 = vmax.f32 %v396, %v392
    %v405 = vrot.slane %v397, 7
    %v406 = vrot.slane %v398, 7
    %v407 = vsel %vm139, %v405, %v406
    %v408 = vrot.slane %v399, 7
    %v409 = vsel %vm139, %v406, %v408
    %v410 = vrot.slane %v400, 7
    %v411 = vsel %vm139, %v408, %v410
    %v416 = vsel %vm139, %v397, %v405
    %v417 = vsel %vm101, %v397, %v416
    %v418 = vsel %vm102, %v398, %v407
    %v419 = vsel %vm103, %v399, %v409
    %v420 = vsel %vm104, %v400, %v411
    %v421 = vrot.slane %v397, 1
    %v422 = vrot.slane %v398, 1
    %v423 = vsel %vm156, %v421, %v422
    %v424 = vrot.slane %v399, 1
    %v425 = vsel %vm156, %v422, %v424
    %v426 = vrot.slane %v400, 1
    %v427 = vsel %vm156, %v424, %v426
    %v432 = vsel %vm156, %v426, %v400
    %v433 = vsel %vm105, %v397, %v423
    %v434 = vsel %vm106, %v398, %v425
    %v435 = vsel %vm107, %v399, %v427
    %v436 = vsel %vm108, %v400, %v432
    %v437 = vmax.f32 %v417, %v433
    %v438 = vmax.f32 %v418, %v434
    %v439 = vmax.f32 %v419, %v435
    %v440 = vmax.f32 %v420, %v436
    %v441 = vmax.f32 %v437, %v397
    %v442 = vmax.f32 %v438, %v398
    %v443 = vmax.f32 %v439, %v399
    %v444 = vmax.f32 %v440, %v400
    %445 = vrot.lane.b32.xlu0 %v441, 1
    %v446 = vpop.permute.xlu0 %445
    %447 = vrot.lane.b32.xlu0 %v442, 1
    %v448 = vpop.permute.xlu0 %447
    %449 = vrot.lane.b32.xlu0 %v443, 1
    %v450 = vpop.permute.xlu0 %449
    %451 = vrot.lane.b32.xlu0 %v444, 1
    %v452 = vpop.permute.xlu0 %451
    %v453 = vsel %vm121, %v441, %v446
    %v454 = vsel %vm121, %v442, %v448
    %v455 = vsel %vm121, %v443, %v450
    %v456 = vsel %vm121, %v444, %v452
    %457 = vrot.lane.b32.xlu0 %v441, 127
    %v458 = vpop.permute.xlu0 %457
    %459 = vrot.lane.b32.xlu0 %v442, 127
    %v460 = vpop.permute.xlu0 %459
    %461 = vrot.lane.b32.xlu0 %v443, 127
    %v462 = vpop.permute.xlu0 %461
    %463 = vrot.lane.b32.xlu0 %v444, 127
    %v464 = vpop.permute.xlu0 %463
    %v465 = vsel %vm122, %v441, %v458
    %v466 = vsel %vm122, %v442, %v460
    %v467 = vsel %vm122, %v443, %v462
    %v468 = vsel %vm122, %v444, %v464
    %v469 = vmax.f32 %v453, %v465
    %v470 = vmax.f32 %v454, %v466
    %v471 = vmax.f32 %v455, %v467
    %v472 = vmax.f32 %v456, %v468
    %v473 = vmax.f32 %v469, %v441
    %v474 = vmax.f32 %v470, %v442
    %v475 = vmax.f32 %v471, %v443
    %v476 = vmax.f32 %v472, %v444
    %v477 = vsub.f32 %v213, %v473
    %v478 = vsub.f32 %v214, %v474
    %v479 = vsub.f32 %v215, %v475
    %v480 = vsub.f32 %v216, %v476
    %v481 = vmax.f32 %v477, 0.0
    %v482 = vmax.f32 %v478, 0.0
    %v483 = vmax.f32 %v479, 0.0
    %v484 = vmax.f32 %v480, 0.0
    %v485 = vmul.f32 %v305, %v481
    %v486 = vmul.f32 %v306, %v482
    %v487 = vmul.f32 %v307, %v483
    %v488 = vmul.f32 %v308, %v484
    %v489 = vsub.f32 %v481, %v485
    %v490 = vsub.f32 %v482, %v486
    %v491 = vsub.f32 %v483, %v487
    %v492 = vsub.f32 %v484, %v488
    %v493 = vmax.f32 %v489, 0.0
    %v494 = vmax.f32 %v490, 0.0
    %v495 = vmax.f32 %v491, 0.0
    %v496 = vmax.f32 %v492, 0.0
    %v497 = vadd.f32 %v305, %v493
    %v498 = vadd.f32 %v306, %v494
    %v499 = vadd.f32 %v307, %v495
    %v500 = vadd.f32 %v308, %v496
    %v501 = vmin.f32 %v389, %v390
    %v502 = vmin.f32 %v389, %v391
    %v503 = vmin.f32 %v390, %v392
    %v504 = vmin.f32 %v391, %v392
    %v509 = vrot.slane %v389, 7
    %v510 = vrot.slane %v390, 7
    %v511 = vsel %vm139, %v509, %v510
    %v512 = vrot.slane %v391, 7
    %v513 = vsel %vm139, %v510, %v512
    %v514 = vrot.slane %v392, 7
    %v515 = vsel %vm139, %v512, %v514
    %v520 = vsel %vm139, %v389, %v509
    %v521 = vsel %vm101, %v389, %v520
    %v522 = vsel %vm102, %v390, %v511
    %v523 = vsel %vm103, %v391, %v513
    %v524 = vsel %vm104, %v392, %v515
    %v525 = vrot.slane %v389, 1
    %v526 = vrot.slane %v390, 1
    %v527 = vsel %vm156, %v525, %v526
    %v528 = vrot.slane %v391, 1
    %v529 = vsel %vm156, %v526, %v528
    %v530 = vrot.slane %v392, 1
    %v531 = vsel %vm156, %v528, %v530
    %v536 = vsel %vm156, %v530, %v392
    %v537 = vsel %vm105, %v389, %v527
    %v538 = vsel %vm106, %v390, %v529
    %v539 = vsel %vm107, %v391, %v531
    %v540 = vsel %vm108, %v392, %v536
    %v541 = vmin.f32 %v521, %v537
    %v542 = vmin.f32 %v522, %v538
    %v543 = vmin.f32 %v523, %v539
    %v544 = vmin.f32 %v524, %v540
    %545 = vrot.lane.b32.xlu0 %v389, 1
    %v546 = vpop.permute.xlu0 %545
    %547 = vrot.lane.b32.xlu0 %v390, 1
    %v548 = vpop.permute.xlu0 %547
    %549 = vrot.lane.b32.xlu0 %v391, 1
    %v550 = vpop.permute.xlu0 %549
    %551 = vrot.lane.b32.xlu0 %v392, 1
    %v552 = vpop.permute.xlu0 %551
    %v553 = vsel %vm121, %v389, %v546
    %v554 = vsel %vm121, %v390, %v548
    %v555 = vsel %vm121, %v391, %v550
    %v556 = vsel %vm121, %v392, %v552
    %557 = vrot.lane.b32.xlu0 %v389, 127
    %v558 = vpop.permute.xlu0 %557
    %559 = vrot.lane.b32.xlu0 %v390, 127
    %v560 = vpop.permute.xlu0 %559
    %561 = vrot.lane.b32.xlu0 %v391, 127
    %v562 = vpop.permute.xlu0 %561
    %563 = vrot.lane.b32.xlu0 %v392, 127
    %v564 = vpop.permute.xlu0 %563
    %v565 = vsel %vm122, %v389, %v558
    %v566 = vsel %vm122, %v390, %v560
    %v567 = vsel %vm122, %v391, %v562
    %v568 = vsel %vm122, %v392, %v564
    %v569 = vmin.f32 %v553, %v565
    %v570 = vmin.f32 %v554, %v566
    %v571 = vmin.f32 %v555, %v567
    %v572 = vmin.f32 %v556, %v568
    %v573 = vmin.f32 %v501, %v541
    %v574 = vmin.f32 %v502, %v542
    %v575 = vmin.f32 %v503, %v543
    %v576 = vmin.f32 %v504, %v544
    %v577 = vmin.f32 %v569, %v389
    %v578 = vmin.f32 %v570, %v390
    %v579 = vmin.f32 %v571, %v391
    %v580 = vmin.f32 %v572, %v392
    %v581 = vmin.f32 %v573, %v577
    %v582 = vmin.f32 %v574, %v578
    %v583 = vmin.f32 %v575, %v579
    %v584 = vmin.f32 %v576, %v580
    %v585 = vmax.f32 %v581, %v582
    %v586 = vmax.f32 %v581, %v583
    %v587 = vmax.f32 %v582, %v584
    %v588 = vmax.f32 %v583, %v584
    %v589 = vmax.f32 %v585, %v581
    %v590 = vmax.f32 %v586, %v582
    %v591 = vmax.f32 %v587, %v583
    %v592 = vmax.f32 %v588, %v584
    %v597 = vrot.slane %v589, 7
    %v598 = vrot.slane %v590, 7
    %v599 = vsel %vm139, %v597, %v598
    %v600 = vrot.slane %v591, 7
    %v601 = vsel %vm139, %v598, %v600
    %v602 = vrot.slane %v592, 7
    %v603 = vsel %vm139, %v600, %v602
    %v608 = vsel %vm139, %v589, %v597
    %v609 = vsel %vm101, %v589, %v608
    %v610 = vsel %vm102, %v590, %v599
    %v611 = vsel %vm103, %v591, %v601
    %v612 = vsel %vm104, %v592, %v603
    %v613 = vrot.slane %v589, 1
    %v614 = vrot.slane %v590, 1
    %v615 = vsel %vm156, %v613, %v614
    %v616 = vrot.slane %v591, 1
    %v617 = vsel %vm156, %v614, %v616
    %v618 = vrot.slane %v592, 1
    %v619 = vsel %vm156, %v616, %v618
    %v624 = vsel %vm156, %v618, %v592
    %v625 = vsel %vm105, %v589, %v615
    %v626 = vsel %vm106, %v590, %v617
    %v627 = vsel %vm107, %v591, %v619
    %v628 = vsel %vm108, %v592, %v624
    %v629 = vmax.f32 %v609, %v625
    %v630 = vmax.f32 %v610, %v626
    %v631 = vmax.f32 %v611, %v627
    %v632 = vmax.f32 %v612, %v628
    %v633 = vmax.f32 %v629, %v589
    %v634 = vmax.f32 %v630, %v590
    %v635 = vmax.f32 %v631, %v591
    %v636 = vmax.f32 %v632, %v592
    %637 = vrot.lane.b32.xlu0 %v633, 1
    %v638 = vpop.permute.xlu0 %637
    %639 = vrot.lane.b32.xlu0 %v634, 1
    %v640 = vpop.permute.xlu0 %639
    %641 = vrot.lane.b32.xlu0 %v635, 1
    %v642 = vpop.permute.xlu0 %641
    %643 = vrot.lane.b32.xlu0 %v636, 1
    %v644 = vpop.permute.xlu0 %643
    %v645 = vsel %vm121, %v633, %v638
    %v646 = vsel %vm121, %v634, %v640
    %v647 = vsel %vm121, %v635, %v642
    %v648 = vsel %vm121, %v636, %v644
    %649 = vrot.lane.b32.xlu0 %v633, 127
    %v650 = vpop.permute.xlu0 %649
    %651 = vrot.lane.b32.xlu0 %v634, 127
    %v652 = vpop.permute.xlu0 %651
    %653 = vrot.lane.b32.xlu0 %v635, 127
    %v654 = vpop.permute.xlu0 %653
    %655 = vrot.lane.b32.xlu0 %v636, 127
    %v656 = vpop.permute.xlu0 %655
    %v657 = vsel %vm122, %v633, %v650
    %v658 = vsel %vm122, %v634, %v652
    %v659 = vsel %vm122, %v635, %v654
    %v660 = vsel %vm122, %v636, %v656
    %v661 = vmax.f32 %v645, %v657
    %v662 = vmax.f32 %v646, %v658
    %v663 = vmax.f32 %v647, %v659
    %v664 = vmax.f32 %v648, %v660
    %v665 = vmax.f32 %v661, %v633
    %v666 = vmax.f32 %v662, %v634
    %v667 = vmax.f32 %v663, %v635
    %v668 = vmax.f32 %v664, %v636
    %v669 = vsub.f32 %v389, %v665
    %v670 = vsub.f32 %v390, %v666
    %v671 = vsub.f32 %v391, %v667
    %v672 = vsub.f32 %v392, %v668
    %v673 = vmax.f32 %v669, 0.0
    %v674 = vmax.f32 %v670, 0.0
    %v675 = vmax.f32 %v671, 0.0
    %v676 = vmax.f32 %v672, 0.0
    %v677 = vmul.f32 %v497, %v673
    %v678 = vmul.f32 %v498, %v674
    %v679 = vmul.f32 %v499, %v675
    %v680 = vmul.f32 %v500, %v676
    %v681 = vsub.f32 %v673, %v677
    %v682 = vsub.f32 %v674, %v678
    %v683 = vsub.f32 %v675, %v679
    %v684 = vsub.f32 %v676, %v680
    %v685 = vmax.f32 %v681, 0.0
    %v686 = vmax.f32 %v682, 0.0
    %v687 = vmax.f32 %v683, 0.0
    %v688 = vmax.f32 %v684, 0.0
    %v689 = vadd.f32 %v497, %v685
    %v690 = vadd.f32 %v498, %v686
    %v691 = vadd.f32 %v499, %v687
    %v692 = vadd.f32 %v500, %v688
    %v693 = vmin.f32 %v581, %v582
    %v694 = vmin.f32 %v581, %v583
    %v695 = vmin.f32 %v582, %v584
    %v696 = vmin.f32 %v583, %v584
    %v701 = vrot.slane %v581, 7
    %v702 = vrot.slane %v582, 7
    %v703 = vsel %vm139, %v701, %v702
    %v704 = vrot.slane %v583, 7
    %v705 = vsel %vm139, %v702, %v704
    %v706 = vrot.slane %v584, 7
    %v707 = vsel %vm139, %v704, %v706
    %v712 = vsel %vm139, %v581, %v701
    %v713 = vsel %vm101, %v581, %v712
    %v714 = vsel %vm102, %v582, %v703
    %v715 = vsel %vm103, %v583, %v705
    %v716 = vsel %vm104, %v584, %v707
    %v717 = vrot.slane %v581, 1
    %v718 = vrot.slane %v582, 1
    %v719 = vsel %vm156, %v717, %v718
    %v720 = vrot.slane %v583, 1
    %v721 = vsel %vm156, %v718, %v720
    %v722 = vrot.slane %v584, 1
    %v723 = vsel %vm156, %v720, %v722
    %v728 = vsel %vm156, %v722, %v584
    %v729 = vsel %vm105, %v581, %v719
    %v730 = vsel %vm106, %v582, %v721
    %v731 = vsel %vm107, %v583, %v723
    %v732 = vsel %vm108, %v584, %v728
    %v733 = vmin.f32 %v713, %v729
    %v734 = vmin.f32 %v714, %v730
    %v735 = vmin.f32 %v715, %v731
    %v736 = vmin.f32 %v716, %v732
    %737 = vrot.lane.b32.xlu0 %v581, 1
    %v738 = vpop.permute.xlu0 %737
    %739 = vrot.lane.b32.xlu0 %v582, 1
    %v740 = vpop.permute.xlu0 %739
    %741 = vrot.lane.b32.xlu0 %v583, 1
    %v742 = vpop.permute.xlu0 %741
    %743 = vrot.lane.b32.xlu0 %v584, 1
    %v744 = vpop.permute.xlu0 %743
    %v745 = vsel %vm121, %v581, %v738
    %v746 = vsel %vm121, %v582, %v740
    %v747 = vsel %vm121, %v583, %v742
    %v748 = vsel %vm121, %v584, %v744
    %749 = vrot.lane.b32.xlu0 %v581, 127
    %v750 = vpop.permute.xlu0 %749
    %751 = vrot.lane.b32.xlu0 %v582, 127
    %v752 = vpop.permute.xlu0 %751
    %753 = vrot.lane.b32.xlu0 %v583, 127
    %v754 = vpop.permute.xlu0 %753
    %755 = vrot.lane.b32.xlu0 %v584, 127
    %v756 = vpop.permute.xlu0 %755
    %v757 = vsel %vm122, %v581, %v750
    %v758 = vsel %vm122, %v582, %v752
    %v759 = vsel %vm122, %v583, %v754
    %v760 = vsel %vm122, %v584, %v756
    %v761 = vmin.f32 %v745, %v757
    %v762 = vmin.f32 %v746, %v758
    %v763 = vmin.f32 %v747, %v759
    %v764 = vmin.f32 %v748, %v760
    %v765 = vmin.f32 %v693, %v733
    %v766 = vmin.f32 %v694, %v734
    %v767 = vmin.f32 %v695, %v735
    %v768 = vmin.f32 %v696, %v736
    %v769 = vmin.f32 %v761, %v581
    %v770 = vmin.f32 %v762, %v582
    %v771 = vmin.f32 %v763, %v583
    %v772 = vmin.f32 %v764, %v584
    %v773 = vmin.f32 %v765, %v769
    %v774 = vmin.f32 %v766, %v770
    %v775 = vmin.f32 %v767, %v771
    %v776 = vmin.f32 %v768, %v772
    %v777 = vmax.f32 %v773, %v774
    %v778 = vmax.f32 %v773, %v775
    %v779 = vmax.f32 %v774, %v776
    %v780 = vmax.f32 %v775, %v776
    %v781 = vmax.f32 %v777, %v773
    %v782 = vmax.f32 %v778, %v774
    %v783 = vmax.f32 %v779, %v775
    %v784 = vmax.f32 %v780, %v776
    %v789 = vrot.slane %v781, 7
    %v790 = vrot.slane %v782, 7
    %v791 = vsel %vm139, %v789, %v790
    %v792 = vrot.slane %v783, 7
    %v793 = vsel %vm139, %v790, %v792
    %v794 = vrot.slane %v784, 7
    %v795 = vsel %vm139, %v792, %v794
    %v800 = vsel %vm139, %v781, %v789
    %v801 = vsel %vm101, %v781, %v800
    %v802 = vsel %vm102, %v782, %v791
    %v803 = vsel %vm103, %v783, %v793
    %v804 = vsel %vm104, %v784, %v795
    %v805 = vrot.slane %v781, 1
    %v806 = vrot.slane %v782, 1
    %v807 = vsel %vm156, %v805, %v806
    %v808 = vrot.slane %v783, 1
    %v809 = vsel %vm156, %v806, %v808
    %v810 = vrot.slane %v784, 1
    %v811 = vsel %vm156, %v808, %v810
    %v816 = vsel %vm156, %v810, %v784
    %v817 = vsel %vm105, %v781, %v807
    %v818 = vsel %vm106, %v782, %v809
    %v819 = vsel %vm107, %v783, %v811
    %v820 = vsel %vm108, %v784, %v816
    %v821 = vmax.f32 %v801, %v817
    %v822 = vmax.f32 %v802, %v818
    %v823 = vmax.f32 %v803, %v819
    %v824 = vmax.f32 %v804, %v820
    %v825 = vmax.f32 %v821, %v781
    %v826 = vmax.f32 %v822, %v782
    %v827 = vmax.f32 %v823, %v783
    %v828 = vmax.f32 %v824, %v784
    %829 = vrot.lane.b32.xlu0 %v825, 1
    %v830 = vpop.permute.xlu0 %829
    %831 = vrot.lane.b32.xlu0 %v826, 1
    %v832 = vpop.permute.xlu0 %831
    %833 = vrot.lane.b32.xlu0 %v827, 1
    %v834 = vpop.permute.xlu0 %833
    %835 = vrot.lane.b32.xlu0 %v828, 1
    %v836 = vpop.permute.xlu0 %835
    %v837 = vsel %vm121, %v825, %v830
    %v838 = vsel %vm121, %v826, %v832
    %v839 = vsel %vm121, %v827, %v834
    %v840 = vsel %vm121, %v828, %v836
    %841 = vrot.lane.b32.xlu0 %v825, 127
    %v842 = vpop.permute.xlu0 %841
    %843 = vrot.lane.b32.xlu0 %v826, 127
    %v844 = vpop.permute.xlu0 %843
    %845 = vrot.lane.b32.xlu0 %v827, 127
    %v846 = vpop.permute.xlu0 %845
    %847 = vrot.lane.b32.xlu0 %v828, 127
    %v848 = vpop.permute.xlu0 %847
    %v849 = vsel %vm122, %v825, %v842
    %v850 = vsel %vm122, %v826, %v844
    %v851 = vsel %vm122, %v827, %v846
    %v852 = vsel %vm122, %v828, %v848
    %v853 = vmax.f32 %v837, %v849
    %v854 = vmax.f32 %v838, %v850
    %v855 = vmax.f32 %v839, %v851
    %v856 = vmax.f32 %v840, %v852
    %v857 = vmax.f32 %v853, %v825
    %v858 = vmax.f32 %v854, %v826
    %v859 = vmax.f32 %v855, %v827
    %v860 = vmax.f32 %v856, %v828
    %v861 = vsub.f32 %v581, %v857
    %v862 = vsub.f32 %v582, %v858
    %v863 = vsub.f32 %v583, %v859
    %v864 = vsub.f32 %v584, %v860
    %v865 = vmax.f32 %v861, 0.0
    %v866 = vmax.f32 %v862, 0.0
    %v867 = vmax.f32 %v863, 0.0
    %v868 = vmax.f32 %v864, 0.0
    %v869 = vmul.f32 %v689, %v865
    %v870 = vmul.f32 %v690, %v866
    %v871 = vmul.f32 %v691, %v867
    %v872 = vmul.f32 %v692, %v868
    %v873 = vsub.f32 %v865, %v869
    %v874 = vsub.f32 %v866, %v870
    %v875 = vsub.f32 %v867, %v871
    %v876 = vsub.f32 %v868, %v872
    %v877 = vmax.f32 %v873, 0.0
    %v878 = vmax.f32 %v874, 0.0
    %v879 = vmax.f32 %v875, 0.0
    %v880 = vmax.f32 %v876, 0.0
    %v881 = vadd.f32 %v689, %v877
    %v882 = vadd.f32 %v690, %v878
    %v883 = vadd.f32 %v691, %v879
    %v884 = vadd.f32 %v692, %v880
    %v885 = vmul.f32 %v881, %v123
    %v886 = vmul.f32 %v882, %v124
    %v887 = vmul.f32 %v883, %v125
    %v888 = vmul.f32 %v884, %v126
    %v889 = vadd.f32 %v885, %v886
    %v890 = vadd.f32 %v889, %v887
    %v891 = vadd.f32 %v890, %v888
    %892 = vadd.xlane.f32.xlu0 %v891
    %v893 = vpop.xlane.xlu0 %892
    %v894 = vrot.slane %v893, 4
    %v895 = vadd.f32 %v893, %v894
    %v896 = vrot.slane %v895, 2
    %v897 = vadd.f32 %v895, %v896
    %v898 = vrot.slane %v897, 1
    %v899 = vadd.f32 %v897, %v898
    %s900 = vtos %v899
    %v901 = vadd.f32 %v881, %v882
    %v902 = vadd.f32 %v901, %v883
    %v903 = vadd.f32 %v902, %v884
    %904 = vadd.xlane.f32.xlu0 %v903
    %v905 = vpop.xlane.xlu0 %904
    %v906 = vrot.slane %v905, 4
    %v907 = vadd.f32 %v905, %v906
    %v908 = vrot.slane %v907, 2
    %v909 = vadd.f32 %v907, %v908
    %v910 = vrot.slane %v909, 1
    %v911 = vadd.f32 %v909, %v910
    %s912 = vtos %v911
    %v913 = vmin.f32 %v123, %v124
    %v914 = vmin.f32 %v123, %v125
    %v915 = vmin.f32 %v124, %v126
    %v916 = vmin.f32 %v125, %v126
    %v921 = vrot.slane %v123, 7
    %v922 = vrot.slane %v124, 7
    %v923 = vsel %vm139, %v921, %v922
    %v924 = vrot.slane %v125, 7
    %v925 = vsel %vm139, %v922, %v924
    %v926 = vrot.slane %v126, 7
    %v927 = vsel %vm139, %v924, %v926
    %v932 = vsel %vm139, %v123, %v921
    %v933 = vsel %vm101, %v123, %v932
    %v934 = vsel %vm102, %v124, %v923
    %v935 = vsel %vm103, %v125, %v925
    %v936 = vsel %vm104, %v126, %v927
    %v937 = vrot.slane %v123, 1
    %v938 = vrot.slane %v124, 1
    %v939 = vsel %vm156, %v937, %v938
    %v940 = vrot.slane %v125, 1
    %v941 = vsel %vm156, %v938, %v940
    %v942 = vrot.slane %v126, 1
    %v943 = vsel %vm156, %v940, %v942
    %v948 = vsel %vm156, %v942, %v126
    %v949 = vsel %vm105, %v123, %v939
    %v950 = vsel %vm106, %v124, %v941
    %v951 = vsel %vm107, %v125, %v943
    %v952 = vsel %vm108, %v126, %v948
    %v953 = vmin.f32 %v933, %v949
    %v954 = vmin.f32 %v934, %v950
    %v955 = vmin.f32 %v935, %v951
    %v956 = vmin.f32 %v936, %v952
    %957 = vrot.lane.b32.xlu0 %v123, 1
    %v958 = vpop.permute.xlu0 %957
    %959 = vrot.lane.b32.xlu0 %v124, 1
    %v960 = vpop.permute.xlu0 %959
    %961 = vrot.lane.b32.xlu0 %v125, 1
    %v962 = vpop.permute.xlu0 %961
    %963 = vrot.lane.b32.xlu0 %v126, 1
    %v964 = vpop.permute.xlu0 %963
    %v965 = vsel %vm121, %v123, %v958
    %v966 = vsel %vm121, %v124, %v960
    %v967 = vsel %vm121, %v125, %v962
    %v968 = vsel %vm121, %v126, %v964
    %969 = vrot.lane.b32.xlu0 %v123, 127
    %v970 = vpop.permute.xlu0 %969
    %971 = vrot.lane.b32.xlu0 %v124, 127
    %v972 = vpop.permute.xlu0 %971
    %973 = vrot.lane.b32.xlu0 %v125, 127
    %v974 = vpop.permute.xlu0 %973
    %975 = vrot.lane.b32.xlu0 %v126, 127
    %v976 = vpop.permute.xlu0 %975
    %v977 = vsel %vm122, %v123, %v970
    %v978 = vsel %vm122, %v124, %v972
    %v979 = vsel %vm122, %v125, %v974
    %v980 = vsel %vm122, %v126, %v976
    %v981 = vmin.f32 %v965, %v977
    %v982 = vmin.f32 %v966, %v978
    %v983 = vmin.f32 %v967, %v979
    %v984 = vmin.f32 %v968, %v980
    %v985 = vmin.f32 %v913, %v953
    %v986 = vmin.f32 %v914, %v954
    %v987 = vmin.f32 %v915, %v955
    %v988 = vmin.f32 %v916, %v956
    %v989 = vmin.f32 %v981, %v123
    %v990 = vmin.f32 %v982, %v124
    %v991 = vmin.f32 %v983, %v125
    %v992 = vmin.f32 %v984, %v126
    %v993 = vmin.f32 %v985, %v989
    %v994 = vmin.f32 %v986, %v990
    %v995 = vmin.f32 %v987, %v991
    %v996 = vmin.f32 %v988, %v992
    %v997 = vmax.f32 %v993, %v994
    %v998 = vmax.f32 %v993, %v995
    %v999 = vmax.f32 %v994, %v996
    %v1000 = vmax.f32 %v995, %v996
    %v1001 = vmax.f32 %v997, %v993
    %v1002 = vmax.f32 %v998, %v994
    %v1003 = vmax.f32 %v999, %v995
    %v1004 = vmax.f32 %v1000, %v996
    %v1009 = vrot.slane %v1001, 7
    %v1010 = vrot.slane %v1002, 7
    %v1011 = vsel %vm139, %v1009, %v1010
    %v1012 = vrot.slane %v1003, 7
    %v1013 = vsel %vm139, %v1010, %v1012
    %v1014 = vrot.slane %v1004, 7
    %v1015 = vsel %vm139, %v1012, %v1014
    %v1020 = vsel %vm139, %v1001, %v1009
    %v1021 = vsel %vm101, %v1001, %v1020
    %v1022 = vsel %vm102, %v1002, %v1011
    %v1023 = vsel %vm103, %v1003, %v1013
    %v1024 = vsel %vm104, %v1004, %v1015
    %v1025 = vrot.slane %v1001, 1
    %v1026 = vrot.slane %v1002, 1
    %v1027 = vsel %vm156, %v1025, %v1026
    %v1028 = vrot.slane %v1003, 1
    %v1029 = vsel %vm156, %v1026, %v1028
    %v1030 = vrot.slane %v1004, 1
    %v1031 = vsel %vm156, %v1028, %v1030
    %v1036 = vsel %vm156, %v1030, %v1004
    %v1037 = vsel %vm105, %v1001, %v1027
    %v1038 = vsel %vm106, %v1002, %v1029
    %v1039 = vsel %vm107, %v1003, %v1031
    %v1040 = vsel %vm108, %v1004, %v1036
    %v1041 = vmax.f32 %v1021, %v1037
    %v1042 = vmax.f32 %v1022, %v1038
    %v1043 = vmax.f32 %v1023, %v1039
    %v1044 = vmax.f32 %v1024, %v1040
    %v1045 = vmax.f32 %v1041, %v1001
    %v1046 = vmax.f32 %v1042, %v1002
    %v1047 = vmax.f32 %v1043, %v1003
    %v1048 = vmax.f32 %v1044, %v1004
    %1049 = vrot.lane.b32.xlu0 %v1045, 1
    %v1050 = vpop.permute.xlu0 %1049
    %1051 = vrot.lane.b32.xlu0 %v1046, 1
    %v1052 = vpop.permute.xlu0 %1051
    %1053 = vrot.lane.b32.xlu0 %v1047, 1
    %v1054 = vpop.permute.xlu0 %1053
    %1055 = vrot.lane.b32.xlu0 %v1048, 1
    %v1056 = vpop.permute.xlu0 %1055
    %v1057 = vsel %vm121, %v1045, %v1050
    %v1058 = vsel %vm121, %v1046, %v1052
    %v1059 = vsel %vm121, %v1047, %v1054
    %v1060 = vsel %vm121, %v1048, %v1056
    %1061 = vrot.lane.b32.xlu0 %v1045, 127
    %v1062 = vpop.permute.xlu0 %1061
    %1063 = vrot.lane.b32.xlu0 %v1046, 127
    %v1064 = vpop.permute.xlu0 %1063
    %1065 = vrot.lane.b32.xlu0 %v1047, 127
    %v1066 = vpop.permute.xlu0 %1065
    %1067 = vrot.lane.b32.xlu0 %v1048, 127
    %v1068 = vpop.permute.xlu0 %1067
    %v1069 = vsel %vm122, %v1045, %v1062
    %v1070 = vsel %vm122, %v1046, %v1064
    %v1071 = vsel %vm122, %v1047, %v1066
    %v1072 = vsel %vm122, %v1048, %v1068
    %v1073 = vmax.f32 %v1057, %v1069
    %v1074 = vmax.f32 %v1058, %v1070
    %v1075 = vmax.f32 %v1059, %v1071
    %v1076 = vmax.f32 %v1060, %v1072
    %v1077 = vmax.f32 %v1073, %v1045
    %v1078 = vmax.f32 %v1074, %v1046
    %v1079 = vmax.f32 %v1075, %v1047
    %v1080 = vmax.f32 %v1076, %v1048
    %v1081 = vsub.f32 %v123, %v1077
    %v1082 = vsub.f32 %v124, %v1078
    %v1083 = vsub.f32 %v125, %v1079
    %v1084 = vsub.f32 %v126, %v1080
    %v1085 = vmax.f32 %v1081, 0.0
    %v1086 = vmax.f32 %v1082, 0.0
    %v1087 = vmax.f32 %v1083, 0.0
    %v1088 = vmax.f32 %v1084, 0.0
    %v1089 = vmin.f32 %v993, %v994
    %v1090 = vmin.f32 %v993, %v995
    %v1091 = vmin.f32 %v994, %v996
    %v1092 = vmin.f32 %v995, %v996
    %v1097 = vrot.slane %v993, 7
    %v1098 = vrot.slane %v994, 7
    %v1099 = vsel %vm139, %v1097, %v1098
    %v1100 = vrot.slane %v995, 7
    %v1101 = vsel %vm139, %v1098, %v1100
    %v1102 = vrot.slane %v996, 7
    %v1103 = vsel %vm139, %v1100, %v1102
    %v1108 = vsel %vm139, %v993, %v1097
    %v1109 = vsel %vm101, %v993, %v1108
    %v1110 = vsel %vm102, %v994, %v1099
    %v1111 = vsel %vm103, %v995, %v1101
    %v1112 = vsel %vm104, %v996, %v1103
    %v1113 = vrot.slane %v993, 1
    %v1114 = vrot.slane %v994, 1
    %v1115 = vsel %vm156, %v1113, %v1114
    %v1116 = vrot.slane %v995, 1
    %v1117 = vsel %vm156, %v1114, %v1116
    %v1118 = vrot.slane %v996, 1
    %v1119 = vsel %vm156, %v1116, %v1118
    %v1124 = vsel %vm156, %v1118, %v996
    %v1125 = vsel %vm105, %v993, %v1115
    %v1126 = vsel %vm106, %v994, %v1117
    %v1127 = vsel %vm107, %v995, %v1119
    %v1128 = vsel %vm108, %v996, %v1124
    %v1129 = vmin.f32 %v1109, %v1125
    %v1130 = vmin.f32 %v1110, %v1126
    %v1131 = vmin.f32 %v1111, %v1127
    %v1132 = vmin.f32 %v1112, %v1128
    %1133 = vrot.lane.b32.xlu0 %v993, 1
    %v1134 = vpop.permute.xlu0 %1133
    %1135 = vrot.lane.b32.xlu0 %v994, 1
    %v1136 = vpop.permute.xlu0 %1135
    %1137 = vrot.lane.b32.xlu0 %v995, 1
    %v1138 = vpop.permute.xlu0 %1137
    %1139 = vrot.lane.b32.xlu0 %v996, 1
    %v1140 = vpop.permute.xlu0 %1139
    %v1141 = vsel %vm121, %v993, %v1134
    %v1142 = vsel %vm121, %v994, %v1136
    %v1143 = vsel %vm121, %v995, %v1138
    %v1144 = vsel %vm121, %v996, %v1140
    %1145 = vrot.lane.b32.xlu0 %v993, 127
    %v1146 = vpop.permute.xlu0 %1145
    %1147 = vrot.lane.b32.xlu0 %v994, 127
    %v1148 = vpop.permute.xlu0 %1147
    %1149 = vrot.lane.b32.xlu0 %v995, 127
    %v1150 = vpop.permute.xlu0 %1149
    %1151 = vrot.lane.b32.xlu0 %v996, 127
    %v1152 = vpop.permute.xlu0 %1151
    %v1153 = vsel %vm122, %v993, %v1146
    %v1154 = vsel %vm122, %v994, %v1148
    %v1155 = vsel %vm122, %v995, %v1150
    %v1156 = vsel %vm122, %v996, %v1152
    %v1157 = vmin.f32 %v1141, %v1153
    %v1158 = vmin.f32 %v1142, %v1154
    %v1159 = vmin.f32 %v1143, %v1155
    %v1160 = vmin.f32 %v1144, %v1156
    %v1161 = vmin.f32 %v1089, %v1129
    %v1162 = vmin.f32 %v1090, %v1130
    %v1163 = vmin.f32 %v1091, %v1131
    %v1164 = vmin.f32 %v1092, %v1132
    %v1165 = vmin.f32 %v1157, %v993
    %v1166 = vmin.f32 %v1158, %v994
    %v1167 = vmin.f32 %v1159, %v995
    %v1168 = vmin.f32 %v1160, %v996
    %v1169 = vmin.f32 %v1161, %v1165
    %v1170 = vmin.f32 %v1162, %v1166
    %v1171 = vmin.f32 %v1163, %v1167
    %v1172 = vmin.f32 %v1164, %v1168
    %v1173 = vmax.f32 %v1169, %v1170
    %v1174 = vmax.f32 %v1169, %v1171
    %v1175 = vmax.f32 %v1170, %v1172
    %v1176 = vmax.f32 %v1171, %v1172
    %v1177 = vmax.f32 %v1173, %v1169
    %v1178 = vmax.f32 %v1174, %v1170
    %v1179 = vmax.f32 %v1175, %v1171
    %v1180 = vmax.f32 %v1176, %v1172
    %v1185 = vrot.slane %v1177, 7
    %v1186 = vrot.slane %v1178, 7
    %v1187 = vsel %vm139, %v1185, %v1186
    %v1188 = vrot.slane %v1179, 7
    %v1189 = vsel %vm139, %v1186, %v1188
    %v1190 = vrot.slane %v1180, 7
    %v1191 = vsel %vm139, %v1188, %v1190
    %v1196 = vsel %vm139, %v1177, %v1185
    %v1197 = vsel %vm101, %v1177, %v1196
    %v1198 = vsel %vm102, %v1178, %v1187
    %v1199 = vsel %vm103, %v1179, %v1189
    %v1200 = vsel %vm104, %v1180, %v1191
    %v1201 = vrot.slane %v1177, 1
    %v1202 = vrot.slane %v1178, 1
    %v1203 = vsel %vm156, %v1201, %v1202
    %v1204 = vrot.slane %v1179, 1
    %v1205 = vsel %vm156, %v1202, %v1204
    %v1206 = vrot.slane %v1180, 1
    %v1207 = vsel %vm156, %v1204, %v1206
    %v1212 = vsel %vm156, %v1206, %v1180
    %v1213 = vsel %vm105, %v1177, %v1203
    %v1214 = vsel %vm106, %v1178, %v1205
    %v1215 = vsel %vm107, %v1179, %v1207
    %v1216 = vsel %vm108, %v1180, %v1212
    %v1217 = vmax.f32 %v1197, %v1213
    %v1218 = vmax.f32 %v1198, %v1214
    %v1219 = vmax.f32 %v1199, %v1215
    %v1220 = vmax.f32 %v1200, %v1216
    %v1221 = vmax.f32 %v1217, %v1177
    %v1222 = vmax.f32 %v1218, %v1178
    %v1223 = vmax.f32 %v1219, %v1179
    %v1224 = vmax.f32 %v1220, %v1180
    %1225 = vrot.lane.b32.xlu0 %v1221, 1
    %v1226 = vpop.permute.xlu0 %1225
    %1227 = vrot.lane.b32.xlu0 %v1222, 1
    %v1228 = vpop.permute.xlu0 %1227
    %1229 = vrot.lane.b32.xlu0 %v1223, 1
    %v1230 = vpop.permute.xlu0 %1229
    %1231 = vrot.lane.b32.xlu0 %v1224, 1
    %v1232 = vpop.permute.xlu0 %1231
    %v1233 = vsel %vm121, %v1221, %v1226
    %v1234 = vsel %vm121, %v1222, %v1228
    %v1235 = vsel %vm121, %v1223, %v1230
    %v1236 = vsel %vm121, %v1224, %v1232
    %1237 = vrot.lane.b32.xlu0 %v1221, 127
    %v1238 = vpop.permute.xlu0 %1237
    %1239 = vrot.lane.b32.xlu0 %v1222, 127
    %v1240 = vpop.permute.xlu0 %1239
    %1241 = vrot.lane.b32.xlu0 %v1223, 127
    %v1242 = vpop.permute.xlu0 %1241
    %1243 = vrot.lane.b32.xlu0 %v1224, 127
    %v1244 = vpop.permute.xlu0 %1243
    %v1245 = vsel %vm122, %v1221, %v1238
    %v1246 = vsel %vm122, %v1222, %v1240
    %v1247 = vsel %vm122, %v1223, %v1242
    %v1248 = vsel %vm122, %v1224, %v1244
    %v1249 = vmax.f32 %v1233, %v1245
    %v1250 = vmax.f32 %v1234, %v1246
    %v1251 = vmax.f32 %v1235, %v1247
    %v1252 = vmax.f32 %v1236, %v1248
    %v1253 = vmax.f32 %v1249, %v1221
    %v1254 = vmax.f32 %v1250, %v1222
    %v1255 = vmax.f32 %v1251, %v1223
    %v1256 = vmax.f32 %v1252, %v1224
    %v1257 = vsub.f32 %v993, %v1253
    %v1258 = vsub.f32 %v994, %v1254
    %v1259 = vsub.f32 %v995, %v1255
    %v1260 = vsub.f32 %v996, %v1256
    %v1261 = vmax.f32 %v1257, 0.0
    %v1262 = vmax.f32 %v1258, 0.0
    %v1263 = vmax.f32 %v1259, 0.0
    %v1264 = vmax.f32 %v1260, 0.0
    %v1265 = vmul.f32 %v1085, %v1261
    %v1266 = vmul.f32 %v1086, %v1262
    %v1267 = vmul.f32 %v1087, %v1263
    %v1268 = vmul.f32 %v1088, %v1264
    %v1269 = vsub.f32 %v1261, %v1265
    %v1270 = vsub.f32 %v1262, %v1266
    %v1271 = vsub.f32 %v1263, %v1267
    %v1272 = vsub.f32 %v1264, %v1268
    %v1273 = vmax.f32 %v1269, 0.0
    %v1274 = vmax.f32 %v1270, 0.0
    %v1275 = vmax.f32 %v1271, 0.0
    %v1276 = vmax.f32 %v1272, 0.0
    %v1277 = vadd.f32 %v1085, %v1273
    %v1278 = vadd.f32 %v1086, %v1274
    %v1279 = vadd.f32 %v1087, %v1275
    %v1280 = vadd.f32 %v1088, %v1276
    %v1281 = vmin.f32 %v1169, %v1170
    %v1282 = vmin.f32 %v1169, %v1171
    %v1283 = vmin.f32 %v1170, %v1172
    %v1284 = vmin.f32 %v1171, %v1172
    %v1289 = vrot.slane %v1169, 7
    %v1290 = vrot.slane %v1170, 7
    %v1291 = vsel %vm139, %v1289, %v1290
    %v1292 = vrot.slane %v1171, 7
    %v1293 = vsel %vm139, %v1290, %v1292
    %v1294 = vrot.slane %v1172, 7
    %v1295 = vsel %vm139, %v1292, %v1294
    %v1300 = vsel %vm139, %v1169, %v1289
    %v1301 = vsel %vm101, %v1169, %v1300
    %v1302 = vsel %vm102, %v1170, %v1291
    %v1303 = vsel %vm103, %v1171, %v1293
    %v1304 = vsel %vm104, %v1172, %v1295
    %v1305 = vrot.slane %v1169, 1
    %v1306 = vrot.slane %v1170, 1
    %v1307 = vsel %vm156, %v1305, %v1306
    %v1308 = vrot.slane %v1171, 1
    %v1309 = vsel %vm156, %v1306, %v1308
    %v1310 = vrot.slane %v1172, 1
    %v1311 = vsel %vm156, %v1308, %v1310
    %v1316 = vsel %vm156, %v1310, %v1172
    %v1317 = vsel %vm105, %v1169, %v1307
    %v1318 = vsel %vm106, %v1170, %v1309
    %v1319 = vsel %vm107, %v1171, %v1311
    %v1320 = vsel %vm108, %v1172, %v1316
    %v1321 = vmin.f32 %v1301, %v1317
    %v1322 = vmin.f32 %v1302, %v1318
    %v1323 = vmin.f32 %v1303, %v1319
    %v1324 = vmin.f32 %v1304, %v1320
    %1325 = vrot.lane.b32.xlu0 %v1169, 1
    %v1326 = vpop.permute.xlu0 %1325
    %1327 = vrot.lane.b32.xlu0 %v1170, 1
    %v1328 = vpop.permute.xlu0 %1327
    %1329 = vrot.lane.b32.xlu0 %v1171, 1
    %v1330 = vpop.permute.xlu0 %1329
    %1331 = vrot.lane.b32.xlu0 %v1172, 1
    %v1332 = vpop.permute.xlu0 %1331
    %v1333 = vsel %vm121, %v1169, %v1326
    %v1334 = vsel %vm121, %v1170, %v1328
    %v1335 = vsel %vm121, %v1171, %v1330
    %v1336 = vsel %vm121, %v1172, %v1332
    %1337 = vrot.lane.b32.xlu0 %v1169, 127
    %v1338 = vpop.permute.xlu0 %1337
    %1339 = vrot.lane.b32.xlu0 %v1170, 127
    %v1340 = vpop.permute.xlu0 %1339
    %1341 = vrot.lane.b32.xlu0 %v1171, 127
    %v1342 = vpop.permute.xlu0 %1341
    %1343 = vrot.lane.b32.xlu0 %v1172, 127
    %v1344 = vpop.permute.xlu0 %1343
    %v1345 = vsel %vm122, %v1169, %v1338
    %v1346 = vsel %vm122, %v1170, %v1340
    %v1347 = vsel %vm122, %v1171, %v1342
    %v1348 = vsel %vm122, %v1172, %v1344
    %v1349 = vmin.f32 %v1333, %v1345
    %v1350 = vmin.f32 %v1334, %v1346
    %v1351 = vmin.f32 %v1335, %v1347
    %v1352 = vmin.f32 %v1336, %v1348
    %v1353 = vmin.f32 %v1281, %v1321
    %v1354 = vmin.f32 %v1282, %v1322
    %v1355 = vmin.f32 %v1283, %v1323
    %v1356 = vmin.f32 %v1284, %v1324
    %v1357 = vmin.f32 %v1349, %v1169
    %v1358 = vmin.f32 %v1350, %v1170
    %v1359 = vmin.f32 %v1351, %v1171
    %v1360 = vmin.f32 %v1352, %v1172
    %v1361 = vmin.f32 %v1353, %v1357
    %v1362 = vmin.f32 %v1354, %v1358
    %v1363 = vmin.f32 %v1355, %v1359
    %v1364 = vmin.f32 %v1356, %v1360
    %v1365 = vmax.f32 %v1361, %v1362
    %v1366 = vmax.f32 %v1361, %v1363
    %v1367 = vmax.f32 %v1362, %v1364
    %v1368 = vmax.f32 %v1363, %v1364
    %v1369 = vmax.f32 %v1365, %v1361
    %v1370 = vmax.f32 %v1366, %v1362
    %v1371 = vmax.f32 %v1367, %v1363
    %v1372 = vmax.f32 %v1368, %v1364
    %v1377 = vrot.slane %v1369, 7
    %v1378 = vrot.slane %v1370, 7
    %v1379 = vsel %vm139, %v1377, %v1378
    %v1380 = vrot.slane %v1371, 7
    %v1381 = vsel %vm139, %v1378, %v1380
    %v1382 = vrot.slane %v1372, 7
    %v1383 = vsel %vm139, %v1380, %v1382
    %v1388 = vsel %vm139, %v1369, %v1377
    %v1389 = vsel %vm101, %v1369, %v1388
    %v1390 = vsel %vm102, %v1370, %v1379
    %v1391 = vsel %vm103, %v1371, %v1381
    %v1392 = vsel %vm104, %v1372, %v1383
    %v1393 = vrot.slane %v1369, 1
    %v1394 = vrot.slane %v1370, 1
    %v1395 = vsel %vm156, %v1393, %v1394
    %v1396 = vrot.slane %v1371, 1
    %v1397 = vsel %vm156, %v1394, %v1396
    %v1398 = vrot.slane %v1372, 1
    %v1399 = vsel %vm156, %v1396, %v1398
    %v1404 = vsel %vm156, %v1398, %v1372
    %v1405 = vsel %vm105, %v1369, %v1395
    %v1406 = vsel %vm106, %v1370, %v1397
    %v1407 = vsel %vm107, %v1371, %v1399
    %v1408 = vsel %vm108, %v1372, %v1404
    %v1409 = vmax.f32 %v1389, %v1405
    %v1410 = vmax.f32 %v1390, %v1406
    %v1411 = vmax.f32 %v1391, %v1407
    %v1412 = vmax.f32 %v1392, %v1408
    %v1413 = vmax.f32 %v1409, %v1369
    %v1414 = vmax.f32 %v1410, %v1370
    %v1415 = vmax.f32 %v1411, %v1371
    %v1416 = vmax.f32 %v1412, %v1372
    %1417 = vrot.lane.b32.xlu0 %v1413, 1
    %v1418 = vpop.permute.xlu0 %1417
    %1419 = vrot.lane.b32.xlu0 %v1414, 1
    %v1420 = vpop.permute.xlu0 %1419
    %1421 = vrot.lane.b32.xlu0 %v1415, 1
    %v1422 = vpop.permute.xlu0 %1421
    %1423 = vrot.lane.b32.xlu0 %v1416, 1
    %v1424 = vpop.permute.xlu0 %1423
    %v1425 = vsel %vm121, %v1413, %v1418
    %v1426 = vsel %vm121, %v1414, %v1420
    %v1427 = vsel %vm121, %v1415, %v1422
    %v1428 = vsel %vm121, %v1416, %v1424
    %1429 = vrot.lane.b32.xlu0 %v1413, 127
    %v1430 = vpop.permute.xlu0 %1429
    %1431 = vrot.lane.b32.xlu0 %v1414, 127
    %v1432 = vpop.permute.xlu0 %1431
    %1433 = vrot.lane.b32.xlu0 %v1415, 127
    %v1434 = vpop.permute.xlu0 %1433
    %1435 = vrot.lane.b32.xlu0 %v1416, 127
    %v1436 = vpop.permute.xlu0 %1435
    %v1437 = vsel %vm122, %v1413, %v1430
    %v1438 = vsel %vm122, %v1414, %v1432
    %v1439 = vsel %vm122, %v1415, %v1434
    %v1440 = vsel %vm122, %v1416, %v1436
    %v1441 = vmax.f32 %v1425, %v1437
    %v1442 = vmax.f32 %v1426, %v1438
    %v1443 = vmax.f32 %v1427, %v1439
    %v1444 = vmax.f32 %v1428, %v1440
    %v1445 = vmax.f32 %v1441, %v1413
    %v1446 = vmax.f32 %v1442, %v1414
    %v1447 = vmax.f32 %v1443, %v1415
    %v1448 = vmax.f32 %v1444, %v1416
    %v1449 = vsub.f32 %v1169, %v1445
    %v1450 = vsub.f32 %v1170, %v1446
    %v1451 = vsub.f32 %v1171, %v1447
    %v1452 = vsub.f32 %v1172, %v1448
    %v1453 = vmax.f32 %v1449, 0.0
    %v1454 = vmax.f32 %v1450, 0.0
    %v1455 = vmax.f32 %v1451, 0.0
    %v1456 = vmax.f32 %v1452, 0.0
    %v1457 = vmul.f32 %v1277, %v1453
    %v1458 = vmul.f32 %v1278, %v1454
    %v1459 = vmul.f32 %v1279, %v1455
    %v1460 = vmul.f32 %v1280, %v1456
    %v1461 = vsub.f32 %v1453, %v1457
    %v1462 = vsub.f32 %v1454, %v1458
    %v1463 = vsub.f32 %v1455, %v1459
    %v1464 = vsub.f32 %v1456, %v1460
    %v1465 = vmax.f32 %v1461, 0.0
    %v1466 = vmax.f32 %v1462, 0.0
    %v1467 = vmax.f32 %v1463, 0.0
    %v1468 = vmax.f32 %v1464, 0.0
    %v1469 = vadd.f32 %v1277, %v1465
    %v1470 = vadd.f32 %v1278, %v1466
    %v1471 = vadd.f32 %v1279, %v1467
    %v1472 = vadd.f32 %v1280, %v1468
    %v1473 = vmin.f32 %v1361, %v1362
    %v1474 = vmin.f32 %v1361, %v1363
    %v1475 = vmin.f32 %v1362, %v1364
    %v1476 = vmin.f32 %v1363, %v1364
    %v1481 = vrot.slane %v1361, 7
    %v1482 = vrot.slane %v1362, 7
    %v1483 = vsel %vm139, %v1481, %v1482
    %v1484 = vrot.slane %v1363, 7
    %v1485 = vsel %vm139, %v1482, %v1484
    %v1486 = vrot.slane %v1364, 7
    %v1487 = vsel %vm139, %v1484, %v1486
    %v1492 = vsel %vm139, %v1361, %v1481
    %v1493 = vsel %vm101, %v1361, %v1492
    %v1494 = vsel %vm102, %v1362, %v1483
    %v1495 = vsel %vm103, %v1363, %v1485
    %v1496 = vsel %vm104, %v1364, %v1487
    %v1497 = vrot.slane %v1361, 1
    %v1498 = vrot.slane %v1362, 1
    %v1499 = vsel %vm156, %v1497, %v1498
    %v1500 = vrot.slane %v1363, 1
    %v1501 = vsel %vm156, %v1498, %v1500
    %v1502 = vrot.slane %v1364, 1
    %v1503 = vsel %vm156, %v1500, %v1502
    %v1508 = vsel %vm156, %v1502, %v1364
    %v1509 = vsel %vm105, %v1361, %v1499
    %v1510 = vsel %vm106, %v1362, %v1501
    %v1511 = vsel %vm107, %v1363, %v1503
    %v1512 = vsel %vm108, %v1364, %v1508
    %v1513 = vmin.f32 %v1493, %v1509
    %v1514 = vmin.f32 %v1494, %v1510
    %v1515 = vmin.f32 %v1495, %v1511
    %v1516 = vmin.f32 %v1496, %v1512
    %1517 = vrot.lane.b32.xlu0 %v1361, 1
    %v1518 = vpop.permute.xlu0 %1517
    %1519 = vrot.lane.b32.xlu0 %v1362, 1
    %v1520 = vpop.permute.xlu0 %1519
    %1521 = vrot.lane.b32.xlu0 %v1363, 1
    %v1522 = vpop.permute.xlu0 %1521
    %1523 = vrot.lane.b32.xlu0 %v1364, 1
    %v1524 = vpop.permute.xlu0 %1523
    %v1525 = vsel %vm121, %v1361, %v1518
    %v1526 = vsel %vm121, %v1362, %v1520
    %v1527 = vsel %vm121, %v1363, %v1522
    %v1528 = vsel %vm121, %v1364, %v1524
    %1529 = vrot.lane.b32.xlu0 %v1361, 127
    %v1530 = vpop.permute.xlu0 %1529
    %1531 = vrot.lane.b32.xlu0 %v1362, 127
    %v1532 = vpop.permute.xlu0 %1531
    %1533 = vrot.lane.b32.xlu0 %v1363, 127
    %v1534 = vpop.permute.xlu0 %1533
    %1535 = vrot.lane.b32.xlu0 %v1364, 127
    %v1536 = vpop.permute.xlu0 %1535
    %v1537 = vsel %vm122, %v1361, %v1530
    %v1538 = vsel %vm122, %v1362, %v1532
    %v1539 = vsel %vm122, %v1363, %v1534
    %v1540 = vsel %vm122, %v1364, %v1536
    %v1541 = vmin.f32 %v1525, %v1537
    %v1542 = vmin.f32 %v1526, %v1538
    %v1543 = vmin.f32 %v1527, %v1539
    %v1544 = vmin.f32 %v1528, %v1540
    %v1545 = vmin.f32 %v1473, %v1513
    %v1546 = vmin.f32 %v1474, %v1514
    %v1547 = vmin.f32 %v1475, %v1515
    %v1548 = vmin.f32 %v1476, %v1516
    %v1549 = vmin.f32 %v1541, %v1361
    %v1550 = vmin.f32 %v1542, %v1362
    %v1551 = vmin.f32 %v1543, %v1363
    %v1552 = vmin.f32 %v1544, %v1364
    %v1553 = vmin.f32 %v1545, %v1549
    %v1554 = vmin.f32 %v1546, %v1550
    %v1555 = vmin.f32 %v1547, %v1551
    %v1556 = vmin.f32 %v1548, %v1552
    %v1557 = vmax.f32 %v1553, %v1554
    %v1558 = vmax.f32 %v1553, %v1555
    %v1559 = vmax.f32 %v1554, %v1556
    %v1560 = vmax.f32 %v1555, %v1556
    %v1561 = vmax.f32 %v1557, %v1553
    %v1562 = vmax.f32 %v1558, %v1554
    %v1563 = vmax.f32 %v1559, %v1555
    %v1564 = vmax.f32 %v1560, %v1556
    %v1569 = vrot.slane %v1561, 7
    %v1570 = vrot.slane %v1562, 7
    %v1571 = vsel %vm139, %v1569, %v1570
    %v1572 = vrot.slane %v1563, 7
    %v1573 = vsel %vm139, %v1570, %v1572
    %v1574 = vrot.slane %v1564, 7
    %v1575 = vsel %vm139, %v1572, %v1574
    %v1580 = vsel %vm139, %v1561, %v1569
    %v1581 = vsel %vm101, %v1561, %v1580
    %v1582 = vsel %vm102, %v1562, %v1571
    %v1583 = vsel %vm103, %v1563, %v1573
    %v1584 = vsel %vm104, %v1564, %v1575
    %v1585 = vrot.slane %v1561, 1
    %v1586 = vrot.slane %v1562, 1
    %v1587 = vsel %vm156, %v1585, %v1586
    %v1588 = vrot.slane %v1563, 1
    %v1589 = vsel %vm156, %v1586, %v1588
    %v1590 = vrot.slane %v1564, 1
    %v1591 = vsel %vm156, %v1588, %v1590
    %v1596 = vsel %vm156, %v1590, %v1564
    %v1597 = vsel %vm105, %v1561, %v1587
    %v1598 = vsel %vm106, %v1562, %v1589
    %v1599 = vsel %vm107, %v1563, %v1591
    %v1600 = vsel %vm108, %v1564, %v1596
    %v1601 = vmax.f32 %v1581, %v1597
    %v1602 = vmax.f32 %v1582, %v1598
    %v1603 = vmax.f32 %v1583, %v1599
    %v1604 = vmax.f32 %v1584, %v1600
    %v1605 = vmax.f32 %v1601, %v1561
    %v1606 = vmax.f32 %v1602, %v1562
    %v1607 = vmax.f32 %v1603, %v1563
    %v1608 = vmax.f32 %v1604, %v1564
    %1609 = vrot.lane.b32.xlu0 %v1605, 1
    %v1610 = vpop.permute.xlu0 %1609
    %1611 = vrot.lane.b32.xlu0 %v1606, 1
    %v1612 = vpop.permute.xlu0 %1611
    %1613 = vrot.lane.b32.xlu0 %v1607, 1
    %v1614 = vpop.permute.xlu0 %1613
    %1615 = vrot.lane.b32.xlu0 %v1608, 1
    %v1616 = vpop.permute.xlu0 %1615
    %v1617 = vsel %vm121, %v1605, %v1610
    %v1618 = vsel %vm121, %v1606, %v1612
    %v1619 = vsel %vm121, %v1607, %v1614
    %v1620 = vsel %vm121, %v1608, %v1616
    %1621 = vrot.lane.b32.xlu0 %v1605, 127
    %v1622 = vpop.permute.xlu0 %1621
    %1623 = vrot.lane.b32.xlu0 %v1606, 127
    %v1624 = vpop.permute.xlu0 %1623
    %1625 = vrot.lane.b32.xlu0 %v1607, 127
    %v1626 = vpop.permute.xlu0 %1625
    %1627 = vrot.lane.b32.xlu0 %v1608, 127
    %v1628 = vpop.permute.xlu0 %1627
    %v1629 = vsel %vm122, %v1605, %v1622
    %v1630 = vsel %vm122, %v1606, %v1624
    %v1631 = vsel %vm122, %v1607, %v1626
    %v1632 = vsel %vm122, %v1608, %v1628
    %v1633 = vmax.f32 %v1617, %v1629
    %v1634 = vmax.f32 %v1618, %v1630
    %v1635 = vmax.f32 %v1619, %v1631
    %v1636 = vmax.f32 %v1620, %v1632
    %v1637 = vmax.f32 %v1633, %v1605
    %v1638 = vmax.f32 %v1634, %v1606
    %v1639 = vmax.f32 %v1635, %v1607
    %v1640 = vmax.f32 %v1636, %v1608
    %v1641 = vsub.f32 %v1361, %v1637
    %v1642 = vsub.f32 %v1362, %v1638
    %v1643 = vsub.f32 %v1363, %v1639
    %v1644 = vsub.f32 %v1364, %v1640
    %v1645 = vmax.f32 %v1641, 0.0
    %v1646 = vmax.f32 %v1642, 0.0
    %v1647 = vmax.f32 %v1643, 0.0
    %v1648 = vmax.f32 %v1644, 0.0
    %v1649 = vmul.f32 %v1469, %v1645
    %v1650 = vmul.f32 %v1470, %v1646
    %v1651 = vmul.f32 %v1471, %v1647
    %v1652 = vmul.f32 %v1472, %v1648
    %v1653 = vsub.f32 %v1645, %v1649
    %v1654 = vsub.f32 %v1646, %v1650
    %v1655 = vsub.f32 %v1647, %v1651
    %v1656 = vsub.f32 %v1648, %v1652
    %v1657 = vmax.f32 %v1653, 0.0
    %v1658 = vmax.f32 %v1654, 0.0
    %v1659 = vmax.f32 %v1655, 0.0
    %v1660 = vmax.f32 %v1656, 0.0
    %v1661 = vadd.f32 %v1469, %v1657
    %v1662 = vadd.f32 %v1470, %v1658
    %v1663 = vadd.f32 %v1471, %v1659
    %v1664 = vadd.f32 %v1472, %v1660
    %v1665 = vmul.f32 %v1661, %v127
    %v1666 = vmul.f32 %v1662, %v128
    %v1667 = vmul.f32 %v1663, %v129
    %v1668 = vmul.f32 %v1664, %v130
    %v1669 = vadd.f32 %v1665, %v1666
    %v1670 = vadd.f32 %v1669, %v1667
    %v1671 = vadd.f32 %v1670, %v1668
    %1672 = vadd.xlane.f32.xlu0 %v1671
    %v1673 = vpop.xlane.xlu0 %1672
    %v1674 = vrot.slane %v1673, 4
    %v1675 = vadd.f32 %v1673, %v1674
    %v1676 = vrot.slane %v1675, 2
    %v1677 = vadd.f32 %v1675, %v1676
    %v1678 = vrot.slane %v1677, 1
    %v1679 = vadd.f32 %v1677, %v1678
    %s1680 = vtos %v1679
    %v1681 = vadd.f32 %v1661, %v1662
    %v1682 = vadd.f32 %v1681, %v1663
    %v1683 = vadd.f32 %v1682, %v1664
    %1684 = vadd.xlane.f32.xlu0 %v1683
    %v1685 = vpop.xlane.xlu0 %1684
    %v1686 = vrot.slane %v1685, 4
    %v1687 = vadd.f32 %v1685, %v1686
    %v1688 = vrot.slane %v1687, 2
    %v1689 = vadd.f32 %v1687, %v1688
    %v1690 = vrot.slane %v1689, 1
    %v1691 = vadd.f32 %v1689, %v1690
    %s1692 = vtos %v1691
    %v1693 = vstv %s900
    %1694 = vst [vmem:[#allocation7] sm:$0x1] %v1693
    %v1695 = vstv %s912
    %1696 = vst [vmem:[#allocation8] sm:$0x1] %v1695
    %v1697 = vstv %s1680
    %1698 = vst [vmem:[#allocation10] sm:$0x1] %v1697
    %v1699 = vstv %s1692
    %1700 = vst [vmem:[#allocation11] sm:$0x1] %v1699
    // Predicated region
    $region18: #{tpu_custom_call.1} parent=1 // pred_check
      _
    $region19: #{tpu_custom_call.1} parent=1 // pred_check_branch
      %1702 = sbr.rel (0) target = $region21
    $region20: #{tpu_custom_call.1} parent=1 // pred_region
      %s1704 = ssub.s32 16, 16
      %1705 = vsyncadd [#allocation4], %s1704
      %s1707 = sshll.u32 [#allocation7], 4
      %s1708 = int_to_ptr.vmem [resolvable:$true] %s1707
      %1710 = dma.vmem_to_hbm [thread:$0]  %s1708, 16, %s2, [#allocation4]
    $region21: #{tpu_custom_call.1} parent=1 // pred_fallthru
      _
    // Predicated region
    $region22: #{tpu_custom_call.1} parent=1 // pred_check
      _
    $region23: #{tpu_custom_call.1} parent=1 // pred_check_branch
      %1712 = sbr.rel (0) target = $region25
    $region24: #{tpu_custom_call.1} parent=1 // pred_region
      %s1714 = ssub.s32 16, 16
      %1715 = vsyncadd [#allocation9], %s1714
      %s1717 = sshll.u32 [#allocation8], 4
      %s1718 = int_to_ptr.vmem [resolvable:$true] %s1717
      %1720 = dma.vmem_to_hbm [thread:$0]  %s1718, 16, %s3, [#allocation9]
    $region25: #{tpu_custom_call.1} parent=1 // pred_fallthru
      _
    // Predicated region
    $region26: #{tpu_custom_call.1} parent=1 // pred_check
      _
    $region27: #{tpu_custom_call.1} parent=1 // pred_check_branch
      %1722 = sbr.rel (0) target = $region29
    $region28: #{tpu_custom_call.1} parent=1 // pred_region
      %s1724 = ssub.s32 16, 16
      %1725 = vsyncadd [#allocation9], %s1724
      %s1727 = sshll.u32 [#allocation10], 4
      %s1728 = int_to_ptr.vmem [resolvable:$true] %s1727
      %1730 = dma.vmem_to_hbm [thread:$0]  %s1728, 16, %s4, [#allocation9]
    $region29: #{tpu_custom_call.1} parent=1 // pred_fallthru
      _
    // Predicated region
    $region30: #{tpu_custom_call.1} parent=1 // pred_check
      _
    $region31: #{tpu_custom_call.1} parent=1 // pred_check_branch
      %1732 = sbr.rel (0) target = $region33
    $region32: #{tpu_custom_call.1} parent=1 // pred_region
      %s1734 = ssub.s32 16, 16
      %1735 = vsyncadd [#allocation12], %s1734
      %s1737 = sshll.u32 [#allocation11], 4
      %s1738 = int_to_ptr.vmem [resolvable:$true] %s1737
      %1740 = dma.vmem_to_hbm [thread:$0]  %s1738, 16, %s5, [#allocation12]
    $region33: #{tpu_custom_call.1} parent=1 // pred_fallthru
      _
    // Predicated region
    $region34: #{tpu_custom_call.1} parent=1 // pred_check
      _
    $region35: #{tpu_custom_call.1} parent=1 // pred_check_branch
      %1742 = sbr.rel (0) target = $region37
    $region36: #{tpu_custom_call.1} parent=1 // pred_region
      %1743 = dma.done [#allocation4], 16
    $region37: #{tpu_custom_call.1} parent=1 // pred_fallthru
      _
    // Predicated region
    $region38: #{tpu_custom_call.1} parent=1 // pred_check
      _
    $region39: #{tpu_custom_call.1} parent=1 // pred_check_branch
      %1745 = sbr.rel (0) target = $region41
    $region40: #{tpu_custom_call.1} parent=1 // pred_region
      %1746 = dma.done [#allocation9], 16
    $region41: #{tpu_custom_call.1} parent=1 // pred_fallthru
      _
    // Predicated region
    $region42: #{tpu_custom_call.1} parent=1 // pred_check
      _
    $region43: #{tpu_custom_call.1} parent=1 // pred_check_branch
      %1748 = sbr.rel (0) target = $region45
    $region44: #{tpu_custom_call.1} parent=1 // pred_region
      %1749 = dma.done [#allocation9], 16
    $region45: #{tpu_custom_call.1} parent=1 // pred_fallthru
      _
    // Predicated region
    $region46: #{tpu_custom_call.1} parent=1 // pred_check
      _
    $region47: #{tpu_custom_call.1} parent=1 // pred_check_branch
      %1751 = sbr.rel (0) target = $region49
    $region48: #{tpu_custom_call.1} parent=1 // pred_region
      %1752 = dma.done [#allocation12], 16
    $region49: #{tpu_custom_call.1} parent=1 // pred_fallthru
      _
    %1753 = vsyncpa [#allocation3], 1
    %1754 = vsyncpa [#allocation6], 1
    %1755 = vsyncpa [#allocation4], 1
    %1756 = vsyncpa [#allocation9], 1
    %1757 = vsyncpa [#allocation12], 1

</llo_original>
